<compile_context>
chip_gen: v7x
topology: tpu7x:2x2x1
jax: 0.10.0
libtpu: 0.0.40
codegen_flags: <defaults>
</compile_context>

<pallas_src>
import functools

import jax
import jax.numpy as jnp
from jax.experimental import pallas as pl
from jax.experimental.pallas import tpu as pltpu


# --------------------------------------------------------------------------
# helpers
# --------------------------------------------------------------------------
def _cdiv(a, b):
    return (a + b - 1) // b


def _round_up(x, m):
    return _cdiv(x, m) * m


def _vmem_limit_bytes():
    """Generation-aware scoped-VMEM limit (v7x ~38 MiB, v5e/v6e ~77 MiB)."""
    cap = 64 * 1024 * 1024  # conservative default (v7x physical VMEM)
    try:
        cap = int(pltpu.get_tpu_info().vmem_capacity_bytes)
    except Exception:
        pass
    return min(int(cap * 0.6), 96 * 1024 * 1024)


def _select_row_tile(R, W, C_in, C_out, itemsize, vmem_limit, single_buffer_w):
    """Image rows per grid step, from a lane/sublane-PADDED VMEM model."""
    lane = 128
    sub = {1: 32, 2: 16}.get(itemsize, 8)       # sublane packing per dtype
    NC = 4 * C_out
    Wp = _round_up(W, sub)
    # bytes per image-row, per buffer
    x_row = Wp * _round_up(C_in, lane) * itemsize
    out_row = 2 * Wp * _round_up(2 * C_out, lane) * itemsize
    acc_row = Wp * _round_up(NC, lane) * 4       # fp32 accumulator temporaries
    per_tr = 2 * (x_row + out_row) + 2 * acc_row  # dbl-buffered I/O + acc
    # grid-invariant weight (+ fp32 bias)
    w_bufs = 1 if single_buffer_w else 2
    fixed = w_bufs * (_round_up(C_in, sub) * _round_up(NC, lane) * itemsize
                      + 8 * _round_up(NC, lane) * 4)
    budget = int(vmem_limit * 0.85) - fixed       # headroom for Mosaic scratch
    tr = budget // per_tr
    tr = min(tr, max(1, 2048 // max(W, 1)), R)    # cap matmul rows per step
    return max(1, int(tr))


# --------------------------------------------------------------------------
# Pallas kernel: (tr*W, C_in) x (C_in, 4*C_out) matmul + bias, with the 2x2
# spatial interleave fused into the store (kh halves -> two output planes).
# --------------------------------------------------------------------------
def _up_kernel(x_ref, w_ref, b_ref, o_ref, *, precision):
    # x_ref: (tr, W, C_in)        one tile of `tr` image rows
    # w_ref: (C_in, 4*C_out)      columns ordered (kh, kw, co)
    # b_ref: (1, 4*C_out)         fp32 bias, same column order
    # o_ref: (tr, 2, W, 2*C_out)  free row-major view of (N, 2H, 2W, C_out)
    tr, _, W, half = o_ref.shape
    c_in = x_ref.shape[-1]
    x2 = x_ref[...].reshape(tr * W, c_in)
    acc = jnp.dot(x2, w_ref[...], preferred_element_type=jnp.float32,
                  precision=precision)
    acc = acc + b_ref[...]
    # kh=0 columns -> output row 2h, kh=1 columns -> output row 2h+1
    o_ref[:, 0, :, :] = acc[:, :half].reshape(tr, W, half).astype(o_ref.dtype)
    o_ref[:, 1, :, :] = acc[:, half:].reshape(tr, W, half).astype(o_ref.dtype)


# --------------------------------------------------------------------------
# channels-last (NHWC) forward — no layout transposes at all.
# --------------------------------------------------------------------------
def up_forward_nhwc(x_nhwc, weight, bias, *,
                    precision=jax.lax.Precision.HIGHEST):
    """ConvTranspose2d(kernel=2, stride=2) on NHWC input.

    x_nhwc : (N, H, W, C_in)
    weight : (C_in, C_out, 2, 2)   (PyTorch ConvTranspose2d layout)
    bias   : (C_out,)
    returns: (N, 2H, 2W, C_out)
    """
    N, H, W, C_in = x_nhwc.shape
    C_out = weight.shape[1]
    NC = 4 * C_out
    dtype = x_nhwc.dtype
    itemsize = jnp.dtype(dtype).itemsize

    # weight columns ordered (kh, kw, co) so the kh=0 / kh=1 halves are
    # contiguous; bias tiled to the same order, kept fp32 for the accumulator.
    w_flat = jnp.transpose(weight, (0, 2, 3, 1)).reshape(C_in, NC).astype(dtype)
    b_flat = jnp.tile(bias.astype(jnp.float32), 4).reshape(1, NC)

    R = N * H
    x_rows = x_nhwc.reshape(R, W, C_in)           # free row-major view
    vmem_limit = _vmem_limit_bytes()

    # TODO(synk): add K/N tiling of the weight for very large C_in*C_out
    # (weight kept fully VMEM-resident here).

    def run(single_buffer_w):
        tr = _select_row_tile(R, W, C_in, C_out, itemsize, vmem_limit,
                              single_buffer_w)
        grid_r = _cdiv(R, tr)
        # keep the grid even (and >= 2 steps/core when possible) so v7x's two
        # TensorCores get equal shares under dimension_semantics=("parallel",)
        target_min = 4 if R >= 4 else (2 if R >= 2 else 1)
        if grid_r < target_min:
            grid_r = target_min
        if grid_r > 1 and grid_r % 2 == 1:
            grid_r += 1
        grid_r = min(grid_r, R)
        tr = _cdiv(R, grid_r)
        grid_r = _cdiv(R, tr)

        wb_mode = dict(pipeline_mode=pl.Buffered(1)) if single_buffer_w else {}
        return pl.pallas_call(
            functools.partial(_up_kernel, precision=precision),
            out_shape=jax.ShapeDtypeStruct((R, 2, W, 2 * C_out), dtype),
            grid=(grid_r,),
            in_specs=[
                pl.BlockSpec((tr, W, C_in), lambda i: (i, 0, 0)),
                pl.BlockSpec((C_in, NC), lambda i: (0, 0), **wb_mode),
                pl.BlockSpec((1, NC), lambda i: (0, 0), **wb_mode),
            ],
            out_specs=pl.BlockSpec((tr, 2, W, 2 * C_out),
                                   lambda i: (i, 0, 0, 0)),
            compiler_params=pltpu.CompilerParams(
                dimension_semantics=("parallel",),
                vmem_limit_bytes=vmem_limit,
            ),
        )(x_rows, w_flat, b_flat)

    try:
        y_rows = run(single_buffer_w=True)
    except Exception:
        # Installed jax may reject Buffered(1); fall back to default buffering.
        y_rows = run(single_buffer_w=False)

    # (R, 2, W, 2*C_out) is already the row-major layout of (N, 2H, 2W, C_out)
    return y_rows.reshape(N, 2 * H, 2 * W, C_out)


# --------------------------------------------------------------------------
# PyTorch-layout (NCHW) wrapper — matches nn.ConvTranspose2d(k=2, s=2).
# --------------------------------------------------------------------------
def up_forward(x_nchw, weight, bias, **kwargs):
    """(N, C_in, H, W) -> (N, C_out, 2H, 2W).

    The 2x2 interleave is fused into the kernel, so NCHW callers pay exactly
    one output transpose (and one input transpose) here; use up_forward_nhwc
    to avoid both.
    """
    x_nhwc = jnp.transpose(x_nchw, (0, 2, 3, 1))
    y_nhwc = up_forward_nhwc(x_nhwc, weight, bias, **kwargs)
    return jnp.transpose(y_nhwc, (0, 3, 1, 2))


def _reference(x_nchw, weight, bias):
    """Pure-JAX reference for ConvTranspose2d(kernel=2, stride=2)."""
    N, C_in, H, W = x_nchw.shape
    C_out = weight.shape[1]
    y = jnp.einsum("nihw,iokl->nohkwl", x_nchw, weight,
                   precision=jax.lax.Precision.HIGHEST)
    return y.reshape(N, C_out, 2 * H, 2 * W) + bias[None, :, None, None]


if __name__ == "__main__":
    key = jax.random.PRNGKey(0)
    k1, k2, k3 = jax.random.split(key, 3)

    N, C_in, C_out, H, W = 2, 4, 8, 16, 16

    x = jax.random.normal(k1, (N, C_in, H, W), dtype=jnp.float32)
    # ConvTranspose2d weight layout: (C_in, C_out, 2, 2)
    fan = C_in * 2 * 2
    weight = jax.random.uniform(
        k2, (C_in, C_out, 2, 2), dtype=jnp.float32,
        minval=-1.0 / fan ** 0.5, maxval=1.0 / fan ** 0.5)
    bias = jax.random.uniform(
        k3, (C_out,), dtype=jnp.float32,
        minval=-1.0 / fan ** 0.5, maxval=1.0 / fan ** 0.5)

    out = up_forward(x, weight, bias)
    out = jax.block_until_ready(out)

    ref = _reference(x, weight, bias)
    assert out.shape == (N, C_out, 2 * H, 2 * W)
    assert jnp.allclose(out, ref, atol=1e-5, rtol=1e-5), float(
        jnp.max(jnp.abs(out - ref)))

    print("KERNEL_OK")
</pallas_src>

<mosaic_0001>
module attributes {stable_mosaic.version = 11 : i64} {
  func.func @_up_kernel(%arg0: i32, %arg1: memref<8x16x4xf32, #tpu.memory_space<vmem>>, %arg2: memref<4x32xf32, #tpu.memory_space<vmem>>, %arg3: memref<1x32xf32, #tpu.memory_space<vmem>>, %arg4: memref<8x2x16x16xf32, #tpu.memory_space<vmem>>) attributes {dimension_semantics = [#tpu.dimension_semantics<parallel>], iteration_bounds = array<i64: 4>, scalar_prefetch = 0 : i64, scratch_operands = 0 : i64, tpu.core_type = #tpu.core_type<tc>, window_params = [{transform_indices = @transform_0, window_bounds = array<i64: 8, 16, 4>}, {pipeline_mode = #tpu.pipeline_mode<synchronous>, transform_indices = @transform_1, window_bounds = array<i64: 4, 32>}, {pipeline_mode = #tpu.pipeline_mode<synchronous>, transform_indices = @transform_2, window_bounds = array<i64: 1, 32>}, {transform_indices = @transform_3, window_bounds = array<i64: 8, 2, 16, 16>}]} {
    %c0 = arith.constant 0 : index
    %c0_0 = arith.constant 0 : index
    %c0_1 = arith.constant 0 : index
    %0 = vector.load %arg1[%c0, %c0_0, %c0_1] : memref<8x16x4xf32, #tpu.memory_space<vmem>>, vector<8x16x4xf32>
    %1 = vector.shape_cast %0 : vector<8x16x4xf32> to vector<128x4xf32>
    %c0_2 = arith.constant 0 : index
    %c0_3 = arith.constant 0 : index
    %2 = vector.load %arg2[%c0_2, %c0_3] : memref<4x32xf32, #tpu.memory_space<vmem>>, vector<4x32xf32>
    %cst = arith.constant dense<0.000000e+00> : vector<128x32xf32>
    %3 = tpu.matmul %1, %2, %cst {dimension_numbers = #tpu.dot_dimension_numbers<[1], [0], [0], [1], [0, 0, 1, 1], [], []>, precision = #tpu.contract_precision<fp32>} : vector<128x4xf32>, vector<4x32xf32>, vector<128x32xf32> -> vector<128x32xf32>
    %c0_4 = arith.constant 0 : index
    %c0_5 = arith.constant 0 : index
    %4 = vector.load %arg3[%c0_4, %c0_5] : memref<1x32xf32, #tpu.memory_space<vmem>>, vector<1x32xf32>
    %5 = vector.broadcast %4 : vector<1x32xf32> to vector<128x32xf32>
    %6 = arith.addf %3, %5 : vector<128x32xf32>
    %7 = vector.extract_strided_slice %6 {offsets = [0, 0], sizes = [128, 16], strides = [1, 1]} : vector<128x32xf32> to vector<128x16xf32>
    %8 = vector.shape_cast %7 : vector<128x16xf32> to vector<8x16x16xf32>
    %c0_6 = arith.constant 0 : index
    %c0_7 = arith.constant 0 : index
    %c0_8 = arith.constant 0 : index
    %c0_9 = arith.constant 0 : index
    %9 = vector.load %arg4[%c0_6, %c0_7, %c0_8, %c0_9] : memref<8x2x16x16xf32, #tpu.memory_space<vmem>>, vector<8x1x16x16xf32>
    %10 = vector.shape_cast %9 : vector<8x1x16x16xf32> to vector<8x16x16xf32>
    %11 = vector.shape_cast %8 : vector<8x16x16xf32> to vector<8x1x16x16xf32>
    tpu.vector_store %arg4[%c0_6, %c0_7, %c0_8, %c0_9], %11 {strides = array<i32>} : memref<8x2x16x16xf32, #tpu.memory_space<vmem>>, vector<8x1x16x16xf32>,
    %12 = vector.extract_strided_slice %6 {offsets = [0, 16], sizes = [128, 16], strides = [1, 1]} : vector<128x32xf32> to vector<128x16xf32>
    %13 = vector.shape_cast %12 : vector<128x16xf32> to vector<8x16x16xf32>
    %c0_10 = arith.constant 0 : index
    %c1 = arith.constant 1 : index
    %c0_11 = arith.constant 0 : index
    %c0_12 = arith.constant 0 : index
    %14 = vector.load %arg4[%c0_10, %c1, %c0_11, %c0_12] : memref<8x2x16x16xf32, #tpu.memory_space<vmem>>, vector<8x1x16x16xf32>
    %15 = vector.shape_cast %14 : vector<8x1x16x16xf32> to vector<8x16x16xf32>
    %16 = vector.shape_cast %13 : vector<8x16x16xf32> to vector<8x1x16x16xf32>
    tpu.vector_store %arg4[%c0_10, %c1, %c0_11, %c0_12], %16 {strides = array<i32>} : memref<8x2x16x16xf32, #tpu.memory_space<vmem>>, vector<8x1x16x16xf32>,
    return
  }
  func.func @transform_0(%arg0: i32) -> (i32, i32, i32) {
    %c0_i32 = arith.constant 0 : i32
    %c0_i32_0 = arith.constant 0 : i32
    %c0_i32_1 = arith.constant 0 : i32
    return %arg0, %c0_i32, %c0_i32_0 : i32, i32, i32
  }
  func.func @transform_1(%arg0: i32) -> (i32, i32) {
    %c0_i32 = arith.constant 0 : i32
    %c0_i32_0 = arith.constant 0 : i32
    %c0_i32_1 = arith.constant 0 : i32
    return %c0_i32, %c0_i32_0 : i32, i32
  }
  func.func @transform_2(%arg0: i32) -> (i32, i32) {
    %c0_i32 = arith.constant 0 : i32
    %c0_i32_0 = arith.constant 0 : i32
    %c0_i32_1 = arith.constant 0 : i32
    return %c0_i32, %c0_i32_0 : i32, i32
  }
  func.func @transform_3(%arg0: i32) -> (i32, i32, i32, i32) {
    %c0_i32 = arith.constant 0 : i32
    %c0_i32_0 = arith.constant 0 : i32
    %c0_i32_1 = arith.constant 0 : i32
    %c0_i32_2 = arith.constant 0 : i32
    return %arg0, %c0_i32, %c0_i32_0, %c0_i32_1 : i32, i32, i32, i32
  }
}

module attributes {stable_mosaic.version = 11 : i64} {
  func.func @_up_kernel(%arg0: i32, %arg1: memref<8x16x4xf32, #tpu.memory_space<vmem>>, %arg2: memref<4x32xf32, #tpu.memory_space<vmem>>, %arg3: memref<1x32xf32, #tpu.memory_space<vmem>>, %arg4: memref<8x2x16x16xf32, #tpu.memory_space<vmem>>) attributes {dimension_semantics = [#tpu.dimension_semantics<parallel>], iteration_bounds = array<i64: 4>, scalar_prefetch = 0 : i64, scratch_operands = 0 : i64, tpu.core_type = #tpu.core_type<tc>, window_params = [{transform_indices = @transform_0, window_bounds = array<i64: 8, 16, 4>}, {pipeline_mode = #tpu.pipeline_mode<synchronous>, transform_indices = @transform_1, window_bounds = array<i64: 4, 32>}, {pipeline_mode = #tpu.pipeline_mode<synchronous>, transform_indices = @transform_2, window_bounds = array<i64: 1, 32>}, {transform_indices = @transform_3, window_bounds = array<i64: 8, 2, 16, 16>}]} {
    %c0 = arith.constant 0 : index
    %c0_0 = arith.constant 0 : index
    %c0_1 = arith.constant 0 : index
    %0 = vector.load %arg1[%c0, %c0_0, %c0_1] : memref<8x16x4xf32, #tpu.memory_space<vmem>>, vector<8x16x4xf32>
    %1 = vector.shape_cast %0 : vector<8x16x4xf32> to vector<128x4xf32>
    %c0_2 = arith.constant 0 : index
    %c0_3 = arith.constant 0 : index
    %2 = vector.load %arg2[%c0_2, %c0_3] : memref<4x32xf32, #tpu.memory_space<vmem>>, vector<4x32xf32>
    %cst = arith.constant dense<0.000000e+00> : vector<128x32xf32>
    %3 = tpu.matmul %1, %2, %cst {dimension_numbers = #tpu.dot_dimension_numbers<[1], [0], [0], [1], [0, 0, 1, 1], [], []>, precision = #tpu.contract_precision<fp32>} : vector<128x4xf32>, vector<4x32xf32>, vector<128x32xf32> -> vector<128x32xf32>
    %c0_4 = arith.constant 0 : index
    %c0_5 = arith.constant 0 : index
    %4 = vector.load %arg3[%c0_4, %c0_5] : memref<1x32xf32, #tpu.memory_space<vmem>>, vector<1x32xf32>
    %5 = vector.broadcast %4 : vector<1x32xf32> to vector<128x32xf32>
    %6 = arith.addf %3, %5 : vector<128x32xf32>
    %7 = vector.extract_strided_slice %6 {offsets = [0, 0], sizes = [128, 16], strides = [1, 1]} : vector<128x32xf32> to vector<128x16xf32>
    %8 = vector.shape_cast %7 : vector<128x16xf32> to vector<8x16x16xf32>
    %c0_6 = arith.constant 0 : index
    %c0_7 = arith.constant 0 : index
    %c0_8 = arith.constant 0 : index
    %c0_9 = arith.constant 0 : index
    %9 = vector.load %arg4[%c0_6, %c0_7, %c0_8, %c0_9] : memref<8x2x16x16xf32, #tpu.memory_space<vmem>>, vector<8x1x16x16xf32>
    %10 = vector.shape_cast %9 : vector<8x1x16x16xf32> to vector<8x16x16xf32>
    %11 = vector.shape_cast %8 : vector<8x16x16xf32> to vector<8x1x16x16xf32>
    tpu.vector_store %arg4[%c0_6, %c0_7, %c0_8, %c0_9], %11 {strides = array<i32>} : memref<8x2x16x16xf32, #tpu.memory_space<vmem>>, vector<8x1x16x16xf32>,
    %12 = vector.extract_strided_slice %6 {offsets = [0, 16], sizes = [128, 16], strides = [1, 1]} : vector<128x32xf32> to vector<128x16xf32>
    %13 = vector.shape_cast %12 : vector<128x16xf32> to vector<8x16x16xf32>
    %c0_10 = arith.constant 0 : index
    %c1 = arith.constant 1 : index
    %c0_11 = arith.constant 0 : index
    %c0_12 = arith.constant 0 : index
    %14 = vector.load %arg4[%c0_10, %c1, %c0_11, %c0_12] : memref<8x2x16x16xf32, #tpu.memory_space<vmem>>, vector<8x1x16x16xf32>
    %15 = vector.shape_cast %14 : vector<8x1x16x16xf32> to vector<8x16x16xf32>
    %16 = vector.shape_cast %13 : vector<8x16x16xf32> to vector<8x1x16x16xf32>
    tpu.vector_store %arg4[%c0_10, %c1, %c0_11, %c0_12], %16 {strides = array<i32>} : memref<8x2x16x16xf32, #tpu.memory_space<vmem>>, vector<8x1x16x16xf32>,
    return
  }
  func.func @transform_0(%arg0: i32) -> (i32, i32, i32) {
    %c0_i32 = arith.constant 0 : i32
    %c0_i32_0 = arith.constant 0 : i32
    %c0_i32_1 = arith.constant 0 : i32
    return %arg0, %c0_i32, %c0_i32_0 : i32, i32, i32
  }
  func.func @transform_1(%arg0: i32) -> (i32, i32) {
    %c0_i32 = arith.constant 0 : i32
    %c0_i32_0 = arith.constant 0 : i32
    %c0_i32_1 = arith.constant 0 : i32
    return %c0_i32, %c0_i32_0 : i32, i32
  }
  func.func @transform_2(%arg0: i32) -> (i32, i32) {
    %c0_i32 = arith.constant 0 : i32
    %c0_i32_0 = arith.constant 0 : i32
    %c0_i32_1 = arith.constant 0 : i32
    return %c0_i32, %c0_i32_0 : i32, i32
  }
  func.func @transform_3(%arg0: i32) -> (i32, i32, i32, i32) {
    %c0_i32 = arith.constant 0 : i32
    %c0_i32_0 = arith.constant 0 : i32
    %c0_i32_1 = arith.constant 0 : i32
    %c0_i32_2 = arith.constant 0 : i32
    return %arg0, %c0_i32, %c0_i32_0, %c0_i32_1 : i32, i32, i32, i32
  }
}

</mosaic_0001>

<llo_original>
// kernel: tpu_custom_call.1
$region0: #{tpu_custom_call.1}
  #allocation0 [shape = 'u32[]', space=smem, size = 0x4, offset = 0x4, fixed_abs, tag = 'smem constant byte address 0x4 - core index']
  #allocation1 [shape = 'u32[144,128]{1,0:T(1,128)}', space=vmem, size = 0x12000, scoped, tag = 'internal scratch']
  %s0 = inlined_call_operand.vmem [shape: f32[32,16,4], index: 0, kind: input, shape index: {}]
  %s1 = inlined_call_operand.vmem [shape: f32[4,32], index: 1, kind: input, shape index: {}]
  %s2 = inlined_call_operand.vmem [shape: f32[1,32], index: 2, kind: input, shape index: {}]
  %s3 = inlined_call_operand.vmem [shape: f32[32,2,16,16], index: 3, kind: output, shape index: {}]
  %s4 = sld [smem:[#allocation0]]
  $region45: #{tpu_custom_call.1} parent=0
    _
  %s6 = ssub.s32 1, %s4
  %s7 = scalar_select 0, %s6, %s4
  loop: start=0, step=1, limit=6
  $region2: #{tpu_custom_call.1} parent=0 // loop_pre_header
    _
  $region3: #{tpu_custom_call.1} parent=0 // loop_header
    %s9 = sphi 0, %s13
    %p10 = scmp.ge.s32.totalorder %s9, 6
    %s19 = sphi 0, %s21
    %s22 = sphi 0, %s19
    %s23 = sphi 0, %s22
    %s39 = sphi 0, %s23
    %s43 = sphi 0, %s43
    %s45 = sphi 0, %s43
    %s46 = sphi 0, %s45
    %s60 = sphi 0, %s46
    %s64 = sphi 0, %s64
    %s66 = sphi 0, %s64
    %s67 = sphi 0, %s66
    %s81 = sphi 0, %s67
    %s87 = sphi 0, %s89
    %s90 = sphi 0, %s87
    %s91 = sphi 0, %s90
    %s107 = sphi 0, %s91
  $region4: #{tpu_custom_call.1} parent=0 // loop_header_branch
    %12 = sbr.rel (%p10) target = $region8
  $region5: #{tpu_custom_call.1} parent=0 // loop_body
    %s14 = ssub.s32 %s9, 1
    %s15 = ssub.s32 %s9, 2
    %s16 = sadd.s32 %s9, 1
    %s17 = ssub.s32 %s9, %s16
    %p18 = scmp.eq.s32.totalorder %s17, 0
    %s20 = sadd.s32 %s19, 1
    %s21 = scalar_select %p18, %s19, %s20
    %p24 = pneg %p18
    %p25 = scmp.eq.s32.totalorder %s9, 3
    %p26 = por %p24, %p25
    %p27 = scmp.ne.s32.totalorder %s19, %s22
    %p28 = scmp.eq.s32.totalorder %s9, 0
    %p29 = por %p27, %p28
    %p30 = scmp.ne.s32.totalorder %s19, %s22
    %p31 = scmp.eq.s32.totalorder %s14, 3
    %p32 = por %p30, %p31
    %p33 = scmp.ne.s32.totalorder %s22, %s23
    %p34 = scmp.eq.s32.totalorder %s14, 0
    %p35 = por %p33, %p34
    %p36 = scmp.ne.s32.totalorder %s22, %s23
    %p37 = scmp.eq.s32.totalorder %s15, 3
    %p38 = por %p36, %p37
    %p40 = scmp.ne.s32.totalorder %s23, %s39
    %p41 = scmp.eq.s32.totalorder %s15, 0
    %p42 = por %p40, %p41
    %s44 = sadd.s32 %s43, 1
    %p47 = scmp.eq.s32.totalorder %s9, 3
    %p48 = scmp.ne.s32.totalorder %s43, %s45
    %p49 = scmp.eq.s32.totalorder %s9, 0
    %p50 = por %p48, %p49
    %p51 = scmp.ne.s32.totalorder %s43, %s45
    %p52 = scmp.eq.s32.totalorder %s14, 3
    %p53 = por %p51, %p52
    %p54 = scmp.ne.s32.totalorder %s45, %s46
    %p55 = scmp.eq.s32.totalorder %s14, 0
    %p56 = por %p54, %p55
    %p57 = scmp.ne.s32.totalorder %s45, %s46
    %p58 = scmp.eq.s32.totalorder %s15, 3
    %p59 = por %p57, %p58
    %p61 = scmp.ne.s32.totalorder %s46, %s60
    %p62 = scmp.eq.s32.totalorder %s15, 0
    %p63 = por %p61, %p62
    %s65 = sadd.s32 %s64, 1
    %p68 = scmp.eq.s32.totalorder %s9, 3
    %p69 = scmp.ne.s32.totalorder %s64, %s66
    %p70 = scmp.eq.s32.totalorder %s9, 0
    %p71 = por %p69, %p70
    %p72 = scmp.ne.s32.totalorder %s64, %s66
    %p73 = scmp.eq.s32.totalorder %s14, 3
    %p74 = por %p72, %p73
    %p75 = scmp.ne.s32.totalorder %s66, %s67
    %p76 = scmp.eq.s32.totalorder %s14, 0
    %p77 = por %p75, %p76
    %p78 = scmp.ne.s32.totalorder %s66, %s67
    %p79 = scmp.eq.s32.totalorder %s15, 3
    %p80 = por %p78, %p79
    %p82 = scmp.ne.s32.totalorder %s67, %s81
    %p83 = scmp.eq.s32.totalorder %s15, 0
    %p84 = por %p82, %p83
    %s85 = ssub.s32 %s9, %s16
    %p86 = scmp.eq.s32.totalorder %s85, 0
    %s88 = sadd.s32 %s87, 1
    %s89 = scalar_select %p86, %s87, %s88
    %p92 = pneg %p86
    %p93 = scmp.eq.s32.totalorder %s9, 3
    %p94 = por %p92, %p93
    %p95 = scmp.ne.s32.totalorder %s87, %s90
    %p96 = scmp.eq.s32.totalorder %s9, 0
    %p97 = por %p95, %p96
    %p98 = scmp.ne.s32.totalorder %s87, %s90
    %p99 = scmp.eq.s32.totalorder %s14, 3
    %p100 = por %p98, %p99
    %p101 = scmp.ne.s32.totalorder %s90, %s91
    %p102 = scmp.eq.s32.totalorder %s14, 0
    %p103 = por %p101, %p102
    %p104 = scmp.ne.s32.totalorder %s90, %s91
    %p105 = scmp.eq.s32.totalorder %s15, 3
    %p106 = por %p104, %p105
    %p108 = scmp.ne.s32.totalorder %s91, %s107
    %p109 = scmp.eq.s32.totalorder %s15, 0
    %p110 = por %p108, %p109
    %p111 = scmp.le.s32.totalorder 1, %s9
    %p112 = scmp.lt.s32.totalorder %s9, 5
    %p113 = pnand %p111, %p112
    %p114 = pneg %p113
    // Predicated region
    $region9: #{tpu_custom_call.1} parent=5 // pred_check
      _
    $region10: #{tpu_custom_call.1} parent=5 // pred_check_branch
      %116 = sbr.rel (%p113) target = $region12
    $region11: #{tpu_custom_call.1} parent=5 // pred_region
      %s117 = ssub.s32 %s9, 1
      // Predicated region
      $region13: #{tpu_custom_call.1} parent=11 // pred_check
        %p118 = pneg %p56
      $region14: #{tpu_custom_call.1} parent=11 // pred_check_branch
        %120 = sbr.rel (%p118) target = $region16
      $region15: #{tpu_custom_call.1} parent=11 // pred_region
        _
      $region16: #{tpu_custom_call.1} parent=11 // pred_fallthru
        _
      // Predicated region
      $region17: #{tpu_custom_call.1} parent=11 // pred_check
        %p121 = pneg %p77
      $region18: #{tpu_custom_call.1} parent=11 // pred_check_branch
        %123 = sbr.rel (%p121) target = $region20
      $region19: #{tpu_custom_call.1} parent=11 // pred_region
        _
      $region20: #{tpu_custom_call.1} parent=11 // pred_fallthru
        _
    $region12: #{tpu_custom_call.1} parent=5 // pred_fallthru
      _
    %p124 = scmp.lt.s32.totalorder %s9, 4
    // Predicated region
    $region21: #{tpu_custom_call.1} parent=5 // pred_check
      %p125 = pneg %p124
    $region22: #{tpu_custom_call.1} parent=5 // pred_check_branch
      %127 = sbr.rel (%p125) target = $region24
    $region23: #{tpu_custom_call.1} parent=5 // pred_region
      // Predicated region
      $region25: #{tpu_custom_call.1} parent=23 // pred_check
        %p128 = pneg %p29
      $region26: #{tpu_custom_call.1} parent=23 // pred_check_branch
        %130 = sbr.rel (%p128) target = $region28
      $region27: #{tpu_custom_call.1} parent=23 // pred_region
        %s131 = smul.u32 8, %s9
        %p132 = scmp.lt.s32.totalorder %s131, 31
        %s133 = scalar_select %p132, %s131, 31
        %s134 = smul.addr %s133, 2
        %s135 = smul.addr %s134, 8
        %s136 = scalar_lea.vmem %s0, %s135
        %s137 = smul.u32 8, %s9
      $region28: #{tpu_custom_call.1} parent=23 // pred_fallthru
        _
    $region24: #{tpu_custom_call.1} parent=5 // pred_fallthru
      _
    %p138 = scmp.le.s32.totalorder 1, %s9
    %p139 = scmp.lt.s32.totalorder %s9, 5
    %p140 = pnand %p138, %p139
    %p141 = pneg %p140
    // Predicated region
    $region29: #{tpu_custom_call.1} parent=5 // pred_check
      _
    $region30: #{tpu_custom_call.1} parent=5 // pred_check_branch
      %143 = sbr.rel (%p140) target = $region32
    $region31: #{tpu_custom_call.1} parent=5 // pred_region
      %s144 = ssub.s32 %s9, 1
      %s145 = smul.u32 8, %s14
      %p146 = scmp.lt.s32.totalorder %s145, 31
      %s147 = scalar_select %p146, %s145, 31
      %s148 = smul.addr %s147, 2
      %s149 = smul.addr %s148, 8
      %s150 = scalar_lea.vmem %s0, %s149
      %p151 = pneg %p35
      %p152 = pneg %p32
      %p153 = pneg %p56
      %p154 = pneg %p53
      %p155 = pneg %p77
      %p156 = pneg %p74
      %p157 = pneg %p103
      %p158 = pneg %p100
      %s159 = smul.u32 8, %s14
      %p160 = scmp.lt.s32.totalorder %s159, 31
      %s161 = scalar_select %p160, %s159, 31
      %s162 = smul.addr %s161, 4
      %s163 = smul.addr %s162, 8
      %s164 = scalar_lea.vmem %s3, %s163
      %s165 = smul.u32 8, %s14
      %p166 = scmp.lt.s32.totalorder %s165, 31
      %s167 = scalar_select %p166, %s165, 31
      %s168 = smul.addr %s167, 2
      %s169 = smul.addr %s168, 8
      %s170 = scalar_lea.vmem %s0, %s169
      %s171 = smul.u32 8, %s14
      %s172 = smul.u32 8, %s14
      %p173 = scmp.lt.s32.totalorder %s172, 31
      %s174 = scalar_select %p173, %s172, 31
      %s175 = smul.addr %s174, 4
      %s176 = smul.addr %s175, 8
      %s177 = scalar_lea.vmem %s3, %s176
      %s178 = smul.u32 8, %s14
      %v179 = vld [vmem:[%s170] sm:$0xff]
      %v180 = vld [vmem:[%s170 + $0x8] sm:$0xff]
      %v181 = vld [vmem:[%s170 + $0x10] sm:$0xff]
      %v182 = vld [vmem:[%s170 + $0x18] sm:$0xff]
      %v183 = vld [vmem:[%s170 + $0x20] sm:$0xff]
      %v184 = vld [vmem:[%s170 + $0x28] sm:$0xff]
      %v185 = vld [vmem:[%s170 + $0x30] sm:$0xff]
      %v186 = vld [vmem:[%s170 + $0x38] sm:$0xff]
      %v187 = vld [vmem:[%s170 + $0x40] sm:$0xff]
      %v188 = vld [vmem:[%s170 + $0x48] sm:$0xff]
      %v189 = vld [vmem:[%s170 + $0x50] sm:$0xff]
      %v190 = vld [vmem:[%s170 + $0x58] sm:$0xff]
      %v191 = vld [vmem:[%s170 + $0x60] sm:$0xff]
      %v192 = vld [vmem:[%s170 + $0x68] sm:$0xff]
      %v193 = vld [vmem:[%s170 + $0x70] sm:$0xff]
      %v194 = vld [vmem:[%s170 + $0x78] sm:$0xff]
      %v195 = vld [vmem:[%s1] sm:$0xf]
      %v196 = vld [vmem:[%s2] sm:$0x1]
      %v198 = vlaneseq
      %v199 = vshrl.u32 %v198, 7
      %v200 = vsub.s32 0, %v199
      %v201 = vrot.slane %v196, %v200
      %vm203 = vcmask 31744
      %v205 = vsel %vm203, %v179, 0
      %v208 = vsel %vm203, %v180, 0
      %v211 = vsel %vm203, %v181, 0
      %v214 = vsel %vm203, %v182, 0
      %v217 = vsel %vm203, %v183, 0
      %v220 = vsel %vm203, %v184, 0
      %v223 = vsel %vm203, %v185, 0
      %v226 = vsel %vm203, %v186, 0
      %v229 = vsel %vm203, %v187, 0
      %v232 = vsel %vm203, %v188, 0
      %v235 = vsel %vm203, %v189, 0
      %v238 = vsel %vm203, %v190, 0
      %v241 = vsel %vm203, %v191, 0
      %v244 = vsel %vm203, %v192, 0
      %v247 = vsel %vm203, %v193, 0
      %v250 = vsel %vm203, %v194, 0
      %vm252 = vcmask 1043456
      %v254 = vsel %vm252, %v195, 0
      %256 = vmatprep.subr.mxu0 0.0
      %v257 = vand.u32 %v254, 4294901760
      %258 = vmatpush1.msra.mxu0 %v257
      %259 = vmatprep.subr.mxu0 0.0
      %260 = vmatpush1.msra.mxu0 0.0
      %261 = vmatprep.subr.mxu0 0.0
      %262 = vmatpush1.msra.mxu0 0.0
      %263 = vmatprep.subr.mxu0 0.0
      %264 = vmatpush1.msra.mxu0 0.0
      %265 = vmatprep.subr.mxu0 0.0
      %266 = vmatpush1.msra.mxu0 0.0
      %267 = vmatprep.subr.mxu0 0.0
      %268 = vmatpush1.msra.mxu0 0.0
      %269 = vmatprep.subr.mxu0 0.0
      %270 = vmatpush1.msra.mxu0 0.0
      %271 = vmatprep.subr.mxu0 0.0
      %272 = vmatpush1.msra.mxu0 0.0
      %273 = vmatprep.subr.mxu0 0.0
      %274 = vmatpush1.msra.mxu0 0.0
      %275 = vmatprep.subr.mxu0 0.0
      %276 = vmatpush1.msra.mxu0 0.0
      %277 = vmatprep.subr.mxu0 0.0
      %278 = vmatpush1.msra.mxu0 0.0
      %279 = vmatprep.subr.mxu0 0.0
      %280 = vmatpush1.msra.mxu0 0.0
      %281 = vmatprep.subr.mxu0 0.0
      %282 = vmatpush1.msra.mxu0 0.0
      %283 = vmatprep.subr.mxu0 0.0
      %284 = vmatpush1.msra.mxu0 0.0
      %285 = vmatprep.subr.mxu0 0.0
      %286 = vmatpush1.msra.mxu0 0.0
      %287 = vmatprep.subr.mxu0 0.0
      %288 = vmatpush1.msra.mxu0 0.0
      %289 = vmatprep.subr.mxu0 0.0
      %290 = vmatpush1.msra.mxu0 0.0
      %291 = vmatprep.subr.mxu0 0.0
      %292 = vmatpush1.msra.mxu0 0.0
      %293 = vmatprep.subr.mxu0 0.0
      %294 = vmatpush1.msra.mxu0 0.0
      %295 = vmatprep.subr.mxu0 0.0
      %296 = vmatpush1.msra.mxu0 0.0
      %297 = vmatprep.subr.mxu0 0.0
      %298 = vmatpush1.msra.mxu0 0.0
      %299 = vmatprep.subr.mxu0 0.0
      %300 = vmatpush1.msra.mxu0 0.0
      %301 = vmatprep.subr.mxu0 0.0
      %302 = vmatpush1.msra.mxu0 0.0
      %303 = vmatprep.subr.mxu0 0.0
      %304 = vmatpush1.msra.mxu0 0.0
      %305 = vmatprep.subr.mxu0 0.0
      %306 = vmatpush1.msra.mxu0 0.0
      %307 = vmatprep.subr.mxu0 0.0
      %308 = vmatpush1.msra.mxu0 0.0
      %309 = vmatprep.subr.mxu0 0.0
      %310 = vmatpush1.msra.mxu0 0.0
      %311 = vmatprep.subr.mxu0 0.0
      %312 = vmatpush1.msra.mxu0 0.0
      %313 = vmatprep.subr.mxu0 0.0
      %314 = vmatpush1.msra.mxu0 0.0
      %315 = vmatprep.subr.mxu0 0.0
      %316 = vmatpush1.msra.mxu0 0.0
      %317 = vmatprep.subr.mxu0 0.0
      %318 = vmatpush1.msra.mxu0 0.0
      %319 = vmatprep.subr.mxu0 0.0
      %320 = vmatpush1.msra.mxu0 0.0
      %321 = vmatprep.mubr.f32.mxu0 0.0
      %v322 = vand.u32 %v205, 4294901760
      %v323 = vsub.f32 %v205, %v322
      %v324 = vand.u32 %v323, 4294901760
      %v325 = vsub.f32 %v323, %v324
      %v326 = vand.u32 %v325, 4294901760
      %327 = vmatmul.mubr.f32.gmra.mrb[0].mxu0 %v326
      %v328 = vpop.f32.mrb[0].mxu0
      %v329 = vadd.f32 %v201, %v328
      %v330 = vpop.f32.mrb[0].mxu0
      %331 = vmatprep.mubr.f32.mxu0 0.0
      %v332 = vand.u32 %v208, 4294901760
      %v333 = vsub.f32 %v208, %v332
      %v334 = vand.u32 %v333, 4294901760
      %v335 = vsub.f32 %v333, %v334
      %v336 = vand.u32 %v335, 4294901760
      %337 = vmatmul.mubr.f32.gmra.mrb[0].mxu0 %v336
      %v338 = vpop.f32.mrb[0].mxu0
      %v339 = vadd.f32 %v201, %v338
      %v340 = vpop.f32.mrb[0].mxu0
      %341 = vmatprep.mubr.f32.mxu0 0.0
      %v342 = vand.u32 %v211, 4294901760
      %v343 = vsub.f32 %v211, %v342
      %v344 = vand.u32 %v343, 4294901760
      %v345 = vsub.f32 %v343, %v344
      %v346 = vand.u32 %v345, 4294901760
      %347 = vmatmul.mubr.f32.gmra.mrb[0].mxu0 %v346
      %v348 = vpop.f32.mrb[0].mxu0
      %v349 = vadd.f32 %v201, %v348
      %v350 = vpop.f32.mrb[0].mxu0
      %351 = vmatprep.mubr.f32.mxu0 0.0
      %v352 = vand.u32 %v214, 4294901760
      %v353 = vsub.f32 %v214, %v352
      %v354 = vand.u32 %v353, 4294901760
      %v355 = vsub.f32 %v353, %v354
      %v356 = vand.u32 %v355, 4294901760
      %357 = vmatmul.mubr.f32.gmra.mrb[0].mxu0 %v356
      %v358 = vpop.f32.mrb[0].mxu0
      %v359 = vadd.f32 %v201, %v358
      %v360 = vpop.f32.mrb[0].mxu0
      %361 = vmatprep.mubr.f32.mxu0 0.0
      %v362 = vand.u32 %v217, 4294901760
      %v363 = vsub.f32 %v217, %v362
      %v364 = vand.u32 %v363, 4294901760
      %v365 = vsub.f32 %v363, %v364
      %v366 = vand.u32 %v365, 4294901760
      %367 = vmatmul.mubr.f32.gmra.mrb[0].mxu0 %v366
      %v368 = vpop.f32.mrb[0].mxu0
      %v369 = vadd.f32 %v201, %v368
      %v370 = vpop.f32.mrb[0].mxu0
      %371 = vmatprep.mubr.f32.mxu0 0.0
      %v372 = vand.u32 %v220, 4294901760
      %v373 = vsub.f32 %v220, %v372
      %v374 = vand.u32 %v373, 4294901760
      %v375 = vsub.f32 %v373, %v374
      %v376 = vand.u32 %v375, 4294901760
      %377 = vmatmul.mubr.f32.gmra.mrb[0].mxu0 %v376
      %v378 = vpop.f32.mrb[0].mxu0
      %v379 = vadd.f32 %v201, %v378
      %v380 = vpop.f32.mrb[0].mxu0
      %381 = vmatprep.mubr.f32.mxu0 0.0
      %v382 = vand.u32 %v223, 4294901760
      %v383 = vsub.f32 %v223, %v382
      %v384 = vand.u32 %v383, 4294901760
      %v385 = vsub.f32 %v383, %v384
      %v386 = vand.u32 %v385, 4294901760
      %387 = vmatmul.mubr.f32.gmra.mrb[0].mxu0 %v386
      %v388 = vpop.f32.mrb[0].mxu0
      %v389 = vadd.f32 %v201, %v388
      %v390 = vpop.f32.mrb[0].mxu0
      %391 = vmatprep.mubr.f32.mxu0 0.0
      %v392 = vand.u32 %v226, 4294901760
      %v393 = vsub.f32 %v226, %v392
      %v394 = vand.u32 %v393, 4294901760
      %v395 = vsub.f32 %v393, %v394
      %v396 = vand.u32 %v395, 4294901760
      %397 = vmatmul.mubr.f32.gmra.mrb[0].mxu0 %v396
      %v398 = vpop.f32.mrb[0].mxu0
      %v399 = vadd.f32 %v201, %v398
      %v400 = vpop.f32.mrb[0].mxu0
      %401 = vmatprep.mubr.f32.mxu0 0.0
      %v402 = vand.u32 %v229, 4294901760
      %v403 = vsub.f32 %v229, %v402
      %v404 = vand.u32 %v403, 4294901760
      %v405 = vsub.f32 %v403, %v404
      %v406 = vand.u32 %v405, 4294901760
      %407 = vmatmul.mubr.f32.gmra.mrb[0].mxu0 %v406
      %v408 = vpop.f32.mrb[0].mxu0
      %v409 = vadd.f32 %v201, %v408
      %v410 = vpop.f32.mrb[0].mxu0
      %411 = vmatprep.mubr.f32.mxu0 0.0
      %v412 = vand.u32 %v232, 4294901760
      %v413 = vsub.f32 %v232, %v412
      %v414 = vand.u32 %v413, 4294901760
      %v415 = vsub.f32 %v413, %v414
      %v416 = vand.u32 %v415, 4294901760
      %417 = vmatmul.mubr.f32.gmra.mrb[0].mxu0 %v416
      %v418 = vpop.f32.mrb[0].mxu0
      %v419 = vadd.f32 %v201, %v418
      %v420 = vpop.f32.mrb[0].mxu0
      %421 = vmatprep.mubr.f32.mxu0 0.0
      %v422 = vand.u32 %v235, 4294901760
      %v423 = vsub.f32 %v235, %v422
      %v424 = vand.u32 %v423, 4294901760
      %v425 = vsub.f32 %v423, %v424
      %v426 = vand.u32 %v425, 4294901760
      %427 = vmatmul.mubr.f32.gmra.mrb[0].mxu0 %v426
      %v428 = vpop.f32.mrb[0].mxu0
      %v429 = vadd.f32 %v201, %v428
      %v430 = vpop.f32.mrb[0].mxu0
      %431 = vmatprep.mubr.f32.mxu0 0.0
      %v432 = vand.u32 %v238, 4294901760
      %v433 = vsub.f32 %v238, %v432
      %v434 = vand.u32 %v433, 4294901760
      %v435 = vsub.f32 %v433, %v434
      %v436 = vand.u32 %v435, 4294901760
      %437 = vmatmul.mubr.f32.gmra.mrb[0].mxu0 %v436
      %v438 = vpop.f32.mrb[0].mxu0
      %v439 = vadd.f32 %v201, %v438
      %v440 = vpop.f32.mrb[0].mxu0
      %441 = vmatprep.mubr.f32.mxu0 0.0
      %v442 = vand.u32 %v241, 4294901760
      %v443 = vsub.f32 %v241, %v442
      %v444 = vand.u32 %v443, 4294901760
      %v445 = vsub.f32 %v443, %v444
      %v446 = vand.u32 %v445, 4294901760
      %447 = vmatmul.mubr.f32.gmra.mrb[0].mxu0 %v446
      %v448 = vpop.f32.mrb[0].mxu0
      %v449 = vadd.f32 %v201, %v448
      %v450 = vpop.f32.mrb[0].mxu0
      %451 = vmatprep.mubr.f32.mxu0 0.0
      %v452 = vand.u32 %v244, 4294901760
      %v453 = vsub.f32 %v244, %v452
      %v454 = vand.u32 %v453, 4294901760
      %v455 = vsub.f32 %v453, %v454
      %v456 = vand.u32 %v455, 4294901760
      %457 = vmatmul.mubr.f32.gmra.mrb[0].mxu0 %v456
      %v458 = vpop.f32.mrb[0].mxu0
      %v459 = vadd.f32 %v201, %v458
      %v460 = vpop.f32.mrb[0].mxu0
      %461 = vmatprep.mubr.f32.mxu0 0.0
      %v462 = vand.u32 %v247, 4294901760
      %v463 = vsub.f32 %v247, %v462
      %v464 = vand.u32 %v463, 4294901760
      %v465 = vsub.f32 %v463, %v464
      %v466 = vand.u32 %v465, 4294901760
      %467 = vmatmul.mubr.f32.gmra.mrb[0].mxu0 %v466
      %v468 = vpop.f32.mrb[0].mxu0
      %v469 = vadd.f32 %v201, %v468
      %v470 = vpop.f32.mrb[0].mxu0
      %471 = vmatprep.mubr.f32.mxu0 0.0
      %v472 = vand.u32 %v250, 4294901760
      %v473 = vsub.f32 %v250, %v472
      %v474 = vand.u32 %v473, 4294901760
      %v475 = vsub.f32 %v473, %v474
      %v476 = vand.u32 %v475, 4294901760
      %477 = vmatmul.mubr.f32.gmra.mrb[0].mxu0 %v476
      %v478 = vpop.f32.mrb[0].mxu0
      %v479 = vadd.f32 %v201, %v478
      %v480 = vpop.f32.mrb[0].mxu0
      %481 = vdwg.mxu0
      %482 = vmatprep.subr.mxu0 0.0
      %v483 = vand.u32 %v254, 4294901760
      %v484 = vsub.f32 %v254, %v483
      %v485 = vand.u32 %v484, 4294901760
      %v486 = vsub.f32 %v484, %v485
      %v487 = vand.u32 %v486, 4294901760
      %488 = vmatpush1.msra.mxu0 %v487
      %489 = vmatprep.subr.mxu0 0.0
      %490 = vmatpush1.msra.mxu0 0.0
      %491 = vmatprep.subr.mxu0 0.0
      %492 = vmatpush1.msra.mxu0 0.0
      %493 = vmatprep.subr.mxu0 0.0
      %494 = vmatpush1.msra.mxu0 0.0
      %495 = vmatprep.subr.mxu0 0.0
      %496 = vmatpush1.msra.mxu0 0.0
      %497 = vmatprep.subr.mxu0 0.0
      %498 = vmatpush1.msra.mxu0 0.0
      %499 = vmatprep.subr.mxu0 0.0
      %500 = vmatpush1.msra.mxu0 0.0
      %501 = vmatprep.subr.mxu0 0.0
      %502 = vmatpush1.msra.mxu0 0.0
      %503 = vmatprep.subr.mxu0 0.0
      %504 = vmatpush1.msra.mxu0 0.0
      %505 = vmatprep.subr.mxu0 0.0
      %506 = vmatpush1.msra.mxu0 0.0
      %507 = vmatprep.subr.mxu0 0.0
      %508 = vmatpush1.msra.mxu0 0.0
      %509 = vmatprep.subr.mxu0 0.0
      %510 = vmatpush1.msra.mxu0 0.0
      %511 = vmatprep.subr.mxu0 0.0
      %512 = vmatpush1.msra.mxu0 0.0
      %513 = vmatprep.subr.mxu0 0.0
      %514 = vmatpush1.msra.mxu0 0.0
      %515 = vmatprep.subr.mxu0 0.0
      %516 = vmatpush1.msra.mxu0 0.0
      %517 = vmatprep.subr.mxu0 0.0
      %518 = vmatpush1.msra.mxu0 0.0
      %519 = vmatprep.subr.mxu0 0.0
      %520 = vmatpush1.msra.mxu0 0.0
      %521 = vmatprep.subr.mxu0 0.0
      %522 = vmatpush1.msra.mxu0 0.0
      %523 = vmatprep.subr.mxu0 0.0
      %524 = vmatpush1.msra.mxu0 0.0
      %525 = vmatprep.subr.mxu0 0.0
      %526 = vmatpush1.msra.mxu0 0.0
      %527 = vmatprep.subr.mxu0 0.0
      %528 = vmatpush1.msra.mxu0 0.0
      %529 = vmatprep.subr.mxu0 0.0
      %530 = vmatpush1.msra.mxu0 0.0
      %531 = vmatprep.subr.mxu0 0.0
      %532 = vmatpush1.msra.mxu0 0.0
      %533 = vmatprep.subr.mxu0 0.0
      %534 = vmatpush1.msra.mxu0 0.0
      %535 = vmatprep.subr.mxu0 0.0
      %536 = vmatpush1.msra.mxu0 0.0
      %537 = vmatprep.subr.mxu0 0.0
      %538 = vmatpush1.msra.mxu0 0.0
      %539 = vmatprep.subr.mxu0 0.0
      %540 = vmatpush1.msra.mxu0 0.0
      %541 = vmatprep.subr.mxu0 0.0
      %542 = vmatpush1.msra.mxu0 0.0
      %543 = vmatprep.subr.mxu0 0.0
      %544 = vmatpush1.msra.mxu0 0.0
      %545 = vmatprep.subr.mxu0 0.0
      %546 = vmatpush1.msra.mxu0 0.0
      %547 = vmatprep.subr.mxu0 0.0
      %548 = vmatpush1.msra.mxu0 0.0
      %549 = vmatprep.subr.mxu0 0.0
      %550 = vmatpush1.msra.mxu0 0.0
      %551 = vmatprep.mubr.f32.mxu0 0.0
      %v552 = vand.u32 %v205, 4294901760
      %553 = vmatmul.mubr.f32.gmra.mrb[0].mxu0 %v552
      %v554 = vpop.f32.mrb[0].mxu0
      %v555 = vadd.f32 %v329, %v554
      %v556 = vpop.f32.mrb[0].mxu0
      %557 = vmatprep.mubr.f32.mxu0 0.0
      %v558 = vand.u32 %v208, 4294901760
      %559 = vmatmul.mubr.f32.gmra.mrb[0].mxu0 %v558
      %v560 = vpop.f32.mrb[0].mxu0
      %v561 = vadd.f32 %v339, %v560
      %v562 = vpop.f32.mrb[0].mxu0
      %563 = vmatprep.mubr.f32.mxu0 0.0
      %v564 = vand.u32 %v211, 4294901760
      %565 = vmatmul.mubr.f32.gmra.mrb[0].mxu0 %v564
      %v566 = vpop.f32.mrb[0].mxu0
      %v567 = vadd.f32 %v349, %v566
      %v568 = vpop.f32.mrb[0].mxu0
      %569 = vmatprep.mubr.f32.mxu0 0.0
      %v570 = vand.u32 %v214, 4294901760
      %571 = vmatmul.mubr.f32.gmra.mrb[0].mxu0 %v570
      %v572 = vpop.f32.mrb[0].mxu0
      %v573 = vadd.f32 %v359, %v572
      %v574 = vpop.f32.mrb[0].mxu0
      %575 = vmatprep.mubr.f32.mxu0 0.0
      %v576 = vand.u32 %v217, 4294901760
      %577 = vmatmul.mubr.f32.gmra.mrb[0].mxu0 %v576
      %v578 = vpop.f32.mrb[0].mxu0
      %v579 = vadd.f32 %v369, %v578
      %v580 = vpop.f32.mrb[0].mxu0
      %581 = vmatprep.mubr.f32.mxu0 0.0
      %v582 = vand.u32 %v220, 4294901760
      %583 = vmatmul.mubr.f32.gmra.mrb[0].mxu0 %v582
      %v584 = vpop.f32.mrb[0].mxu0
      %v585 = vadd.f32 %v379, %v584
      %v586 = vpop.f32.mrb[0].mxu0
      %587 = vmatprep.mubr.f32.mxu0 0.0
      %v588 = vand.u32 %v223, 4294901760
      %589 = vmatmul.mubr.f32.gmra.mrb[0].mxu0 %v588
      %v590 = vpop.f32.mrb[0].mxu0
      %v591 = vadd.f32 %v389, %v590
      %v592 = vpop.f32.mrb[0].mxu0
      %593 = vmatprep.mubr.f32.mxu0 0.0
      %v594 = vand.u32 %v226, 4294901760
      %595 = vmatmul.mubr.f32.gmra.mrb[0].mxu0 %v594
      %v596 = vpop.f32.mrb[0].mxu0
      %v597 = vadd.f32 %v399, %v596
      %v598 = vpop.f32.mrb[0].mxu0
      %599 = vmatprep.mubr.f32.mxu0 0.0
      %v600 = vand.u32 %v229, 4294901760
      %601 = vmatmul.mubr.f32.gmra.mrb[0].mxu0 %v600
      %v602 = vpop.f32.mrb[0].mxu0
      %v603 = vadd.f32 %v409, %v602
      %v604 = vpop.f32.mrb[0].mxu0
      %605 = vmatprep.mubr.f32.mxu0 0.0
      %v606 = vand.u32 %v232, 4294901760
      %607 = vmatmul.mubr.f32.gmra.mrb[0].mxu0 %v606
      %v608 = vpop.f32.mrb[0].mxu0
      %v609 = vadd.f32 %v419, %v608
      %v610 = vpop.f32.mrb[0].mxu0
      %611 = vmatprep.mubr.f32.mxu0 0.0
      %v612 = vand.u32 %v235, 4294901760
      %613 = vmatmul.mubr.f32.gmra.mrb[0].mxu0 %v612
      %v614 = vpop.f32.mrb[0].mxu0
      %v615 = vadd.f32 %v429, %v614
      %v616 = vpop.f32.mrb[0].mxu0
      %617 = vmatprep.mubr.f32.mxu0 0.0
      %v618 = vand.u32 %v238, 4294901760
      %619 = vmatmul.mubr.f32.gmra.mrb[0].mxu0 %v618
      %v620 = vpop.f32.mrb[0].mxu0
      %v621 = vadd.f32 %v439, %v620
      %v622 = vpop.f32.mrb[0].mxu0
      %623 = vmatprep.mubr.f32.mxu0 0.0
      %v624 = vand.u32 %v241, 4294901760
      %625 = vmatmul.mubr.f32.gmra.mrb[0].mxu0 %v624
      %v626 = vpop.f32.mrb[0].mxu0
      %v627 = vadd.f32 %v449, %v626
      %v628 = vpop.f32.mrb[0].mxu0
      %629 = vmatprep.mubr.f32.mxu0 0.0
      %v630 = vand.u32 %v244, 4294901760
      %631 = vmatmul.mubr.f32.gmra.mrb[0].mxu0 %v630
      %v632 = vpop.f32.mrb[0].mxu0
      %v633 = vadd.f32 %v459, %v632
      %v634 = vpop.f32.mrb[0].mxu0
      %635 = vmatprep.mubr.f32.mxu0 0.0
      %v636 = vand.u32 %v247, 4294901760
      %637 = vmatmul.mubr.f32.gmra.mrb[0].mxu0 %v636
      %v638 = vpop.f32.mrb[0].mxu0
      %v639 = vadd.f32 %v469, %v638
      %v640 = vpop.f32.mrb[0].mxu0
      %641 = vmatprep.mubr.f32.mxu0 0.0
      %v642 = vand.u32 %v250, 4294901760
      %643 = vmatmul.mubr.f32.gmra.mrb[0].mxu0 %v642
      %v644 = vpop.f32.mrb[0].mxu0
      %v645 = vadd.f32 %v479, %v644
      %v646 = vpop.f32.mrb[0].mxu0
      %647 = vdwg.mxu0
      %648 = vmatprep.subr.mxu0 0.0
      %v649 = vand.u32 %v254, 4294901760
      %v650 = vsub.f32 %v254, %v649
      %651 = vmatpush1.msra.mxu0 %v650
      %652 = vmatprep.subr.mxu0 0.0
      %653 = vmatpush1.msra.mxu0 0.0
      %654 = vmatprep.subr.mxu0 0.0
      %655 = vmatpush1.msra.mxu0 0.0
      %656 = vmatprep.subr.mxu0 0.0
      %657 = vmatpush1.msra.mxu0 0.0
      %658 = vmatprep.subr.mxu0 0.0
      %659 = vmatpush1.msra.mxu0 0.0
      %660 = vmatprep.subr.mxu0 0.0
      %661 = vmatpush1.msra.mxu0 0.0
      %662 = vmatprep.subr.mxu0 0.0
      %663 = vmatpush1.msra.mxu0 0.0
      %664 = vmatprep.subr.mxu0 0.0
      %665 = vmatpush1.msra.mxu0 0.0
      %666 = vmatprep.subr.mxu0 0.0
      %667 = vmatpush1.msra.mxu0 0.0
      %668 = vmatprep.subr.mxu0 0.0
      %669 = vmatpush1.msra.mxu0 0.0
      %670 = vmatprep.subr.mxu0 0.0
      %671 = vmatpush1.msra.mxu0 0.0
      %672 = vmatprep.subr.mxu0 0.0
      %673 = vmatpush1.msra.mxu0 0.0
      %674 = vmatprep.subr.mxu0 0.0
      %675 = vmatpush1.msra.mxu0 0.0
      %676 = vmatprep.subr.mxu0 0.0
      %677 = vmatpush1.msra.mxu0 0.0
      %678 = vmatprep.subr.mxu0 0.0
      %679 = vmatpush1.msra.mxu0 0.0
      %680 = vmatprep.subr.mxu0 0.0
      %681 = vmatpush1.msra.mxu0 0.0
      %682 = vmatprep.subr.mxu0 0.0
      %683 = vmatpush1.msra.mxu0 0.0
      %684 = vmatprep.subr.mxu0 0.0
      %685 = vmatpush1.msra.mxu0 0.0
      %686 = vmatprep.subr.mxu0 0.0
      %687 = vmatpush1.msra.mxu0 0.0
      %688 = vmatprep.subr.mxu0 0.0
      %689 = vmatpush1.msra.mxu0 0.0
      %690 = vmatprep.subr.mxu0 0.0
      %691 = vmatpush1.msra.mxu0 0.0
      %692 = vmatprep.subr.mxu0 0.0
      %693 = vmatpush1.msra.mxu0 0.0
      %694 = vmatprep.subr.mxu0 0.0
      %695 = vmatpush1.msra.mxu0 0.0
      %696 = vmatprep.subr.mxu0 0.0
      %697 = vmatpush1.msra.mxu0 0.0
      %698 = vmatprep.subr.mxu0 0.0
      %699 = vmatpush1.msra.mxu0 0.0
      %700 = vmatprep.subr.mxu0 0.0
      %701 = vmatpush1.msra.mxu0 0.0
      %702 = vmatprep.subr.mxu0 0.0
      %703 = vmatpush1.msra.mxu0 0.0
      %704 = vmatprep.subr.mxu0 0.0
      %705 = vmatpush1.msra.mxu0 0.0
      %706 = vmatprep.subr.mxu0 0.0
      %707 = vmatpush1.msra.mxu0 0.0
      %708 = vmatprep.subr.mxu0 0.0
      %709 = vmatpush1.msra.mxu0 0.0
      %710 = vmatprep.subr.mxu0 0.0
      %711 = vmatpush1.msra.mxu0 0.0
      %712 = vmatprep.subr.mxu0 0.0
      %713 = vmatpush1.msra.mxu0 0.0
      %714 = vmatprep.mubr.f32.mxu0 0.0
      %v715 = vand.u32 %v205, 4294901760
      %v716 = vsub.f32 %v205, %v715
      %717 = vmatmul.mubr.f32.gmra.mrb[0].mxu0 %v716
      %v718 = vpop.f32.mrb[0].mxu0
      %v719 = vadd.f32 %v555, %v718
      %v720 = vpop.f32.mrb[0].mxu0
      %721 = vmatprep.mubr.f32.mxu0 0.0
      %v722 = vand.u32 %v208, 4294901760
      %v723 = vsub.f32 %v208, %v722
      %724 = vmatmul.mubr.f32.gmra.mrb[0].mxu0 %v723
      %v725 = vpop.f32.mrb[0].mxu0
      %v726 = vadd.f32 %v561, %v725
      %v727 = vpop.f32.mrb[0].mxu0
      %728 = vmatprep.mubr.f32.mxu0 0.0
      %v729 = vand.u32 %v211, 4294901760
      %v730 = vsub.f32 %v211, %v729
      %731 = vmatmul.mubr.f32.gmra.mrb[0].mxu0 %v730
      %v732 = vpop.f32.mrb[0].mxu0
      %v733 = vadd.f32 %v567, %v732
      %v734 = vpop.f32.mrb[0].mxu0
      %735 = vmatprep.mubr.f32.mxu0 0.0
      %v736 = vand.u32 %v214, 4294901760
      %v737 = vsub.f32 %v214, %v736
      %738 = vmatmul.mubr.f32.gmra.mrb[0].mxu0 %v737
      %v739 = vpop.f32.mrb[0].mxu0
      %v740 = vadd.f32 %v573, %v739
      %v741 = vpop.f32.mrb[0].mxu0
      %742 = vmatprep.mubr.f32.mxu0 0.0
      %v743 = vand.u32 %v217, 4294901760
      %v744 = vsub.f32 %v217, %v743
      %745 = vmatmul.mubr.f32.gmra.mrb[0].mxu0 %v744
      %v746 = vpop.f32.mrb[0].mxu0
      %v747 = vadd.f32 %v579, %v746
      %v748 = vpop.f32.mrb[0].mxu0
      %749 = vmatprep.mubr.f32.mxu0 0.0
      %v750 = vand.u32 %v220, 4294901760
      %v751 = vsub.f32 %v220, %v750
      %752 = vmatmul.mubr.f32.gmra.mrb[0].mxu0 %v751
      %v753 = vpop.f32.mrb[0].mxu0
      %v754 = vadd.f32 %v585, %v753
      %v755 = vpop.f32.mrb[0].mxu0
      %756 = vmatprep.mubr.f32.mxu0 0.0
      %v757 = vand.u32 %v223, 4294901760
      %v758 = vsub.f32 %v223, %v757
      %759 = vmatmul.mubr.f32.gmra.mrb[0].mxu0 %v758
      %v760 = vpop.f32.mrb[0].mxu0
      %v761 = vadd.f32 %v591, %v760
      %v762 = vpop.f32.mrb[0].mxu0
      %763 = vmatprep.mubr.f32.mxu0 0.0
      %v764 = vand.u32 %v226, 4294901760
      %v765 = vsub.f32 %v226, %v764
      %766 = vmatmul.mubr.f32.gmra.mrb[0].mxu0 %v765
      %v767 = vpop.f32.mrb[0].mxu0
      %v768 = vadd.f32 %v597, %v767
      %v769 = vpop.f32.mrb[0].mxu0
      %770 = vmatprep.mubr.f32.mxu0 0.0
      %v771 = vand.u32 %v229, 4294901760
      %v772 = vsub.f32 %v229, %v771
      %773 = vmatmul.mubr.f32.gmra.mrb[0].mxu0 %v772
      %v774 = vpop.f32.mrb[0].mxu0
      %v775 = vadd.f32 %v603, %v774
      %v776 = vpop.f32.mrb[0].mxu0
      %777 = vmatprep.mubr.f32.mxu0 0.0
      %v778 = vand.u32 %v232, 4294901760
      %v779 = vsub.f32 %v232, %v778
      %780 = vmatmul.mubr.f32.gmra.mrb[0].mxu0 %v779
      %v781 = vpop.f32.mrb[0].mxu0
      %v782 = vadd.f32 %v609, %v781
      %v783 = vpop.f32.mrb[0].mxu0
      %784 = vmatprep.mubr.f32.mxu0 0.0
      %v785 = vand.u32 %v235, 4294901760
      %v786 = vsub.f32 %v235, %v785
      %787 = vmatmul.mubr.f32.gmra.mrb[0].mxu0 %v786
      %v788 = vpop.f32.mrb[0].mxu0
      %v789 = vadd.f32 %v615, %v788
      %v790 = vpop.f32.mrb[0].mxu0
      %791 = vmatprep.mubr.f32.mxu0 0.0
      %v792 = vand.u32 %v238, 4294901760
      %v793 = vsub.f32 %v238, %v792
      %794 = vmatmul.mubr.f32.gmra.mrb[0].mxu0 %v793
      %v795 = vpop.f32.mrb[0].mxu0
      %v796 = vadd.f32 %v621, %v795
      %v797 = vpop.f32.mrb[0].mxu0
      %798 = vmatprep.mubr.f32.mxu0 0.0
      %v799 = vand.u32 %v241, 4294901760
      %v800 = vsub.f32 %v241, %v799
      %801 = vmatmul.mubr.f32.gmra.mrb[0].mxu0 %v800
      %v802 = vpop.f32.mrb[0].mxu0
      %v803 = vadd.f32 %v627, %v802
      %v804 = vpop.f32.mrb[0].mxu0
      %805 = vmatprep.mubr.f32.mxu0 0.0
      %v806 = vand.u32 %v244, 4294901760
      %v807 = vsub.f32 %v244, %v806
      %808 = vmatmul.mubr.f32.gmra.mrb[0].mxu0 %v807
      %v809 = vpop.f32.mrb[0].mxu0
      %v810 = vadd.f32 %v633, %v809
      %v811 = vpop.f32.mrb[0].mxu0
      %812 = vmatprep.mubr.f32.mxu0 0.0
      %v813 = vand.u32 %v247, 4294901760
      %v814 = vsub.f32 %v247, %v813
      %815 = vmatmul.mubr.f32.gmra.mrb[0].mxu0 %v814
      %v816 = vpop.f32.mrb[0].mxu0
      %v817 = vadd.f32 %v639, %v816
      %v818 = vpop.f32.mrb[0].mxu0
      %819 = vmatprep.mubr.f32.mxu0 0.0
      %v820 = vand.u32 %v250, 4294901760
      %v821 = vsub.f32 %v250, %v820
      %822 = vmatmul.mubr.f32.gmra.mrb[0].mxu0 %v821
      %v823 = vpop.f32.mrb[0].mxu0
      %v824 = vadd.f32 %v645, %v823
      %v825 = vpop.f32.mrb[0].mxu0
      %826 = vdwg.mxu0
      %827 = vmatprep.subr.mxu0 0.0
      %v828 = vand.u32 %v254, 4294901760
      %829 = vmatpush1.msra.mxu0 %v828
      %830 = vmatprep.subr.mxu0 0.0
      %831 = vmatpush1.msra.mxu0 0.0
      %832 = vmatprep.subr.mxu0 0.0
      %833 = vmatpush1.msra.mxu0 0.0
      %834 = vmatprep.subr.mxu0 0.0
      %835 = vmatpush1.msra.mxu0 0.0
      %836 = vmatprep.subr.mxu0 0.0
      %837 = vmatpush1.msra.mxu0 0.0
      %838 = vmatprep.subr.mxu0 0.0
      %839 = vmatpush1.msra.mxu0 0.0
      %840 = vmatprep.subr.mxu0 0.0
      %841 = vmatpush1.msra.mxu0 0.0
      %842 = vmatprep.subr.mxu0 0.0
      %843 = vmatpush1.msra.mxu0 0.0
      %844 = vmatprep.subr.mxu0 0.0
      %845 = vmatpush1.msra.mxu0 0.0
      %846 = vmatprep.subr.mxu0 0.0
      %847 = vmatpush1.msra.mxu0 0.0
      %848 = vmatprep.subr.mxu0 0.0
      %849 = vmatpush1.msra.mxu0 0.0
      %850 = vmatprep.subr.mxu0 0.0
      %851 = vmatpush1.msra.mxu0 0.0
      %852 = vmatprep.subr.mxu0 0.0
      %853 = vmatpush1.msra.mxu0 0.0
      %854 = vmatprep.subr.mxu0 0.0
      %855 = vmatpush1.msra.mxu0 0.0
      %856 = vmatprep.subr.mxu0 0.0
      %857 = vmatpush1.msra.mxu0 0.0
      %858 = vmatprep.subr.mxu0 0.0
      %859 = vmatpush1.msra.mxu0 0.0
      %860 = vmatprep.subr.mxu0 0.0
      %861 = vmatpush1.msra.mxu0 0.0
      %862 = vmatprep.subr.mxu0 0.0
      %863 = vmatpush1.msra.mxu0 0.0
      %864 = vmatprep.subr.mxu0 0.0
      %865 = vmatpush1.msra.mxu0 0.0
      %866 = vmatprep.subr.mxu0 0.0
      %867 = vmatpush1.msra.mxu0 0.0
      %868 = vmatprep.subr.mxu0 0.0
      %869 = vmatpush1.msra.mxu0 0.0
      %870 = vmatprep.subr.mxu0 0.0
      %871 = vmatpush1.msra.mxu0 0.0
      %872 = vmatprep.subr.mxu0 0.0
      %873 = vmatpush1.msra.mxu0 0.0
      %874 = vmatprep.subr.mxu0 0.0
      %875 = vmatpush1.msra.mxu0 0.0
      %876 = vmatprep.subr.mxu0 0.0
      %877 = vmatpush1.msra.mxu0 0.0
      %878 = vmatprep.subr.mxu0 0.0
      %879 = vmatpush1.msra.mxu0 0.0
      %880 = vmatprep.subr.mxu0 0.0
      %881 = vmatpush1.msra.mxu0 0.0
      %882 = vmatprep.subr.mxu0 0.0
      %883 = vmatpush1.msra.mxu0 0.0
      %884 = vmatprep.subr.mxu0 0.0
      %885 = vmatpush1.msra.mxu0 0.0
      %886 = vmatprep.subr.mxu0 0.0
      %887 = vmatpush1.msra.mxu0 0.0
      %888 = vmatprep.subr.mxu0 0.0
      %889 = vmatpush1.msra.mxu0 0.0
      %890 = vmatprep.subr.mxu0 0.0
      %891 = vmatpush1.msra.mxu0 0.0
      %892 = vmatprep.mubr.f32.mxu0 0.0
      %v893 = vand.u32 %v205, 4294901760
      %v894 = vsub.f32 %v205, %v893
      %v895 = vand.u32 %v894, 4294901760
      %896 = vmatmul.mubr.f32.gmra.mrb[0].mxu0 %v895
      %v897 = vpop.f32.mrb[0].mxu0
      %v898 = vadd.f32 %v719, %v897
      %v899 = vpop.f32.mrb[0].mxu0
      %900 = vmatprep.mubr.f32.mxu0 0.0
      %v901 = vand.u32 %v208, 4294901760
      %v902 = vsub.f32 %v208, %v901
      %v903 = vand.u32 %v902, 4294901760
      %904 = vmatmul.mubr.f32.gmra.mrb[0].mxu0 %v903
      %v905 = vpop.f32.mrb[0].mxu0
      %v906 = vadd.f32 %v726, %v905
      %v907 = vpop.f32.mrb[0].mxu0
      %908 = vmatprep.mubr.f32.mxu0 0.0
      %v909 = vand.u32 %v211, 4294901760
      %v910 = vsub.f32 %v211, %v909
      %v911 = vand.u32 %v910, 4294901760
      %912 = vmatmul.mubr.f32.gmra.mrb[0].mxu0 %v911
      %v913 = vpop.f32.mrb[0].mxu0
      %v914 = vadd.f32 %v733, %v913
      %v915 = vpop.f32.mrb[0].mxu0
      %916 = vmatprep.mubr.f32.mxu0 0.0
      %v917 = vand.u32 %v214, 4294901760
      %v918 = vsub.f32 %v214, %v917
      %v919 = vand.u32 %v918, 4294901760
      %920 = vmatmul.mubr.f32.gmra.mrb[0].mxu0 %v919
      %v921 = vpop.f32.mrb[0].mxu0
      %v922 = vadd.f32 %v740, %v921
      %v923 = vpop.f32.mrb[0].mxu0
      %924 = vmatprep.mubr.f32.mxu0 0.0
      %v925 = vand.u32 %v217, 4294901760
      %v926 = vsub.f32 %v217, %v925
      %v927 = vand.u32 %v926, 4294901760
      %928 = vmatmul.mubr.f32.gmra.mrb[0].mxu0 %v927
      %v929 = vpop.f32.mrb[0].mxu0
      %v930 = vadd.f32 %v747, %v929
      %v931 = vpop.f32.mrb[0].mxu0
      %932 = vmatprep.mubr.f32.mxu0 0.0
      %v933 = vand.u32 %v220, 4294901760
      %v934 = vsub.f32 %v220, %v933
      %v935 = vand.u32 %v934, 4294901760
      %936 = vmatmul.mubr.f32.gmra.mrb[0].mxu0 %v935
      %v937 = vpop.f32.mrb[0].mxu0
      %v938 = vadd.f32 %v754, %v937
      %v939 = vpop.f32.mrb[0].mxu0
      %940 = vmatprep.mubr.f32.mxu0 0.0
      %v941 = vand.u32 %v223, 4294901760
      %v942 = vsub.f32 %v223, %v941
      %v943 = vand.u32 %v942, 4294901760
      %944 = vmatmul.mubr.f32.gmra.mrb[0].mxu0 %v943
      %v945 = vpop.f32.mrb[0].mxu0
      %v946 = vadd.f32 %v761, %v945
      %v947 = vpop.f32.mrb[0].mxu0
      %948 = vmatprep.mubr.f32.mxu0 0.0
      %v949 = vand.u32 %v226, 4294901760
      %v950 = vsub.f32 %v226, %v949
      %v951 = vand.u32 %v950, 4294901760
      %952 = vmatmul.mubr.f32.gmra.mrb[0].mxu0 %v951
      %v953 = vpop.f32.mrb[0].mxu0
      %v954 = vadd.f32 %v768, %v953
      %v955 = vpop.f32.mrb[0].mxu0
      %956 = vmatprep.mubr.f32.mxu0 0.0
      %v957 = vand.u32 %v229, 4294901760
      %v958 = vsub.f32 %v229, %v957
      %v959 = vand.u32 %v958, 4294901760
      %960 = vmatmul.mubr.f32.gmra.mrb[0].mxu0 %v959
      %v961 = vpop.f32.mrb[0].mxu0
      %v962 = vadd.f32 %v775, %v961
      %v963 = vpop.f32.mrb[0].mxu0
      %964 = vmatprep.mubr.f32.mxu0 0.0
      %v965 = vand.u32 %v232, 4294901760
      %v966 = vsub.f32 %v232, %v965
      %v967 = vand.u32 %v966, 4294901760
      %968 = vmatmul.mubr.f32.gmra.mrb[0].mxu0 %v967
      %v969 = vpop.f32.mrb[0].mxu0
      %v970 = vadd.f32 %v782, %v969
      %v971 = vpop.f32.mrb[0].mxu0
      %972 = vmatprep.mubr.f32.mxu0 0.0
      %v973 = vand.u32 %v235, 4294901760
      %v974 = vsub.f32 %v235, %v973
      %v975 = vand.u32 %v974, 4294901760
      %976 = vmatmul.mubr.f32.gmra.mrb[0].mxu0 %v975
      %v977 = vpop.f32.mrb[0].mxu0
      %v978 = vadd.f32 %v789, %v977
      %v979 = vpop.f32.mrb[0].mxu0
      %980 = vmatprep.mubr.f32.mxu0 0.0
      %v981 = vand.u32 %v238, 4294901760
      %v982 = vsub.f32 %v238, %v981
      %v983 = vand.u32 %v982, 4294901760
      %984 = vmatmul.mubr.f32.gmra.mrb[0].mxu0 %v983
      %v985 = vpop.f32.mrb[0].mxu0
      %v986 = vadd.f32 %v796, %v985
      %v987 = vpop.f32.mrb[0].mxu0
      %988 = vmatprep.mubr.f32.mxu0 0.0
      %v989 = vand.u32 %v241, 4294901760
      %v990 = vsub.f32 %v241, %v989
      %v991 = vand.u32 %v990, 4294901760
      %992 = vmatmul.mubr.f32.gmra.mrb[0].mxu0 %v991
      %v993 = vpop.f32.mrb[0].mxu0
      %v994 = vadd.f32 %v803, %v993
      %v995 = vpop.f32.mrb[0].mxu0
      %996 = vmatprep.mubr.f32.mxu0 0.0
      %v997 = vand.u32 %v244, 4294901760
      %v998 = vsub.f32 %v244, %v997
      %v999 = vand.u32 %v998, 4294901760
      %1000 = vmatmul.mubr.f32.gmra.mrb[0].mxu0 %v999
      %v1001 = vpop.f32.mrb[0].mxu0
      %v1002 = vadd.f32 %v810, %v1001
      %v1003 = vpop.f32.mrb[0].mxu0
      %1004 = vmatprep.mubr.f32.mxu0 0.0
      %v1005 = vand.u32 %v247, 4294901760
      %v1006 = vsub.f32 %v247, %v1005
      %v1007 = vand.u32 %v1006, 4294901760
      %1008 = vmatmul.mubr.f32.gmra.mrb[0].mxu0 %v1007
      %v1009 = vpop.f32.mrb[0].mxu0
      %v1010 = vadd.f32 %v817, %v1009
      %v1011 = vpop.f32.mrb[0].mxu0
      %1012 = vmatprep.mubr.f32.mxu0 0.0
      %v1013 = vand.u32 %v250, 4294901760
      %v1014 = vsub.f32 %v250, %v1013
      %v1015 = vand.u32 %v1014, 4294901760
      %1016 = vmatmul.mubr.f32.gmra.mrb[0].mxu0 %v1015
      %v1017 = vpop.f32.mrb[0].mxu0
      %v1018 = vadd.f32 %v824, %v1017
      %v1019 = vpop.f32.mrb[0].mxu0
      %1020 = vdwg.mxu0
      %1021 = vmatprep.subr.mxu0 0.0
      %v1022 = vand.u32 %v254, 4294901760
      %v1023 = vsub.f32 %v254, %v1022
      %v1024 = vand.u32 %v1023, 4294901760
      %1025 = vmatpush1.msra.mxu0 %v1024
      %1026 = vmatprep.subr.mxu0 0.0
      %1027 = vmatpush1.msra.mxu0 0.0
      %1028 = vmatprep.subr.mxu0 0.0
      %1029 = vmatpush1.msra.mxu0 0.0
      %1030 = vmatprep.subr.mxu0 0.0
      %1031 = vmatpush1.msra.mxu0 0.0
      %1032 = vmatprep.subr.mxu0 0.0
      %1033 = vmatpush1.msra.mxu0 0.0
      %1034 = vmatprep.subr.mxu0 0.0
      %1035 = vmatpush1.msra.mxu0 0.0
      %1036 = vmatprep.subr.mxu0 0.0
      %1037 = vmatpush1.msra.mxu0 0.0
      %1038 = vmatprep.subr.mxu0 0.0
      %1039 = vmatpush1.msra.mxu0 0.0
      %1040 = vmatprep.subr.mxu0 0.0
      %1041 = vmatpush1.msra.mxu0 0.0
      %1042 = vmatprep.subr.mxu0 0.0
      %1043 = vmatpush1.msra.mxu0 0.0
      %1044 = vmatprep.subr.mxu0 0.0
      %1045 = vmatpush1.msra.mxu0 0.0
      %1046 = vmatprep.subr.mxu0 0.0
      %1047 = vmatpush1.msra.mxu0 0.0
      %1048 = vmatprep.subr.mxu0 0.0
      %1049 = vmatpush1.msra.mxu0 0.0
      %1050 = vmatprep.subr.mxu0 0.0
      %1051 = vmatpush1.msra.mxu0 0.0
      %1052 = vmatprep.subr.mxu0 0.0
      %1053 = vmatpush1.msra.mxu0 0.0
      %1054 = vmatprep.subr.mxu0 0.0
      %1055 = vmatpush1.msra.mxu0 0.0
      %1056 = vmatprep.subr.mxu0 0.0
      %1057 = vmatpush1.msra.mxu0 0.0
      %1058 = vmatprep.subr.mxu0 0.0
      %1059 = vmatpush1.msra.mxu0 0.0
      %1060 = vmatprep.subr.mxu0 0.0
      %1061 = vmatpush1.msra.mxu0 0.0
      %1062 = vmatprep.subr.mxu0 0.0
      %1063 = vmatpush1.msra.mxu0 0.0
      %1064 = vmatprep.subr.mxu0 0.0
      %1065 = vmatpush1.msra.mxu0 0.0
      %1066 = vmatprep.subr.mxu0 0.0
      %1067 = vmatpush1.msra.mxu0 0.0
      %1068 = vmatprep.subr.mxu0 0.0
      %1069 = vmatpush1.msra.mxu0 0.0
      %1070 = vmatprep.subr.mxu0 0.0
      %1071 = vmatpush1.msra.mxu0 0.0
      %1072 = vmatprep.subr.mxu0 0.0
      %1073 = vmatpush1.msra.mxu0 0.0
      %1074 = vmatprep.subr.mxu0 0.0
      %1075 = vmatpush1.msra.mxu0 0.0
      %1076 = vmatprep.subr.mxu0 0.0
      %1077 = vmatpush1.msra.mxu0 0.0
      %1078 = vmatprep.subr.mxu0 0.0
      %1079 = vmatpush1.msra.mxu0 0.0
      %1080 = vmatprep.subr.mxu0 0.0
      %1081 = vmatpush1.msra.mxu0 0.0
      %1082 = vmatprep.subr.mxu0 0.0
      %1083 = vmatpush1.msra.mxu0 0.0
      %1084 = vmatprep.subr.mxu0 0.0
      %1085 = vmatpush1.msra.mxu0 0.0
      %1086 = vmatprep.subr.mxu0 0.0
      %1087 = vmatpush1.msra.mxu0 0.0
      %1088 = vmatprep.mubr.f32.mxu0 0.0
      %v1089 = vand.u32 %v205, 4294901760
      %1090 = vmatmul.mubr.f32.gmra.mrb[0].mxu0 %v1089
      %v1091 = vpop.f32.mrb[0].mxu0
      %v1092 = vadd.f32 %v898, %v1091
      %v1093 = vpop.f32.mrb[0].mxu0
      %1094 = vmatprep.mubr.f32.mxu0 0.0
      %v1095 = vand.u32 %v208, 4294901760
      %1096 = vmatmul.mubr.f32.gmra.mrb[0].mxu0 %v1095
      %v1097 = vpop.f32.mrb[0].mxu0
      %v1098 = vadd.f32 %v906, %v1097
      %v1099 = vpop.f32.mrb[0].mxu0
      %1100 = vmatprep.mubr.f32.mxu0 0.0
      %v1101 = vand.u32 %v211, 4294901760
      %1102 = vmatmul.mubr.f32.gmra.mrb[0].mxu0 %v1101
      %v1103 = vpop.f32.mrb[0].mxu0
      %v1104 = vadd.f32 %v914, %v1103
      %v1105 = vpop.f32.mrb[0].mxu0
      %1106 = vmatprep.mubr.f32.mxu0 0.0
      %v1107 = vand.u32 %v214, 4294901760
      %1108 = vmatmul.mubr.f32.gmra.mrb[0].mxu0 %v1107
      %v1109 = vpop.f32.mrb[0].mxu0
      %v1110 = vadd.f32 %v922, %v1109
      %v1111 = vpop.f32.mrb[0].mxu0
      %1112 = vmatprep.mubr.f32.mxu0 0.0
      %v1113 = vand.u32 %v217, 4294901760
      %1114 = vmatmul.mubr.f32.gmra.mrb[0].mxu0 %v1113
      %v1115 = vpop.f32.mrb[0].mxu0
      %v1116 = vadd.f32 %v930, %v1115
      %v1117 = vpop.f32.mrb[0].mxu0
      %1118 = vmatprep.mubr.f32.mxu0 0.0
      %v1119 = vand.u32 %v220, 4294901760
      %1120 = vmatmul.mubr.f32.gmra.mrb[0].mxu0 %v1119
      %v1121 = vpop.f32.mrb[0].mxu0
      %v1122 = vadd.f32 %v938, %v1121
      %v1123 = vpop.f32.mrb[0].mxu0
      %1124 = vmatprep.mubr.f32.mxu0 0.0
      %v1125 = vand.u32 %v223, 4294901760
      %1126 = vmatmul.mubr.f32.gmra.mrb[0].mxu0 %v1125
      %v1127 = vpop.f32.mrb[0].mxu0
      %v1128 = vadd.f32 %v946, %v1127
      %v1129 = vpop.f32.mrb[0].mxu0
      %1130 = vmatprep.mubr.f32.mxu0 0.0
      %v1131 = vand.u32 %v226, 4294901760
      %1132 = vmatmul.mubr.f32.gmra.mrb[0].mxu0 %v1131
      %v1133 = vpop.f32.mrb[0].mxu0
      %v1134 = vadd.f32 %v954, %v1133
      %v1135 = vpop.f32.mrb[0].mxu0
      %1136 = vmatprep.mubr.f32.mxu0 0.0
      %v1137 = vand.u32 %v229, 4294901760
      %1138 = vmatmul.mubr.f32.gmra.mrb[0].mxu0 %v1137
      %v1139 = vpop.f32.mrb[0].mxu0
      %v1140 = vadd.f32 %v962, %v1139
      %v1141 = vpop.f32.mrb[0].mxu0
      %1142 = vmatprep.mubr.f32.mxu0 0.0
      %v1143 = vand.u32 %v232, 4294901760
      %1144 = vmatmul.mubr.f32.gmra.mrb[0].mxu0 %v1143
      %v1145 = vpop.f32.mrb[0].mxu0
      %v1146 = vadd.f32 %v970, %v1145
      %v1147 = vpop.f32.mrb[0].mxu0
      %1148 = vmatprep.mubr.f32.mxu0 0.0
      %v1149 = vand.u32 %v235, 4294901760
      %1150 = vmatmul.mubr.f32.gmra.mrb[0].mxu0 %v1149
      %v1151 = vpop.f32.mrb[0].mxu0
      %v1152 = vadd.f32 %v978, %v1151
      %v1153 = vpop.f32.mrb[0].mxu0
      %1154 = vmatprep.mubr.f32.mxu0 0.0
      %v1155 = vand.u32 %v238, 4294901760
      %1156 = vmatmul.mubr.f32.gmra.mrb[0].mxu0 %v1155
      %v1157 = vpop.f32.mrb[0].mxu0
      %v1158 = vadd.f32 %v986, %v1157
      %v1159 = vpop.f32.mrb[0].mxu0
      %1160 = vmatprep.mubr.f32.mxu0 0.0
      %v1161 = vand.u32 %v241, 4294901760
      %1162 = vmatmul.mubr.f32.gmra.mrb[0].mxu0 %v1161
      %v1163 = vpop.f32.mrb[0].mxu0
      %v1164 = vadd.f32 %v994, %v1163
      %v1165 = vpop.f32.mrb[0].mxu0
      %1166 = vmatprep.mubr.f32.mxu0 0.0
      %v1167 = vand.u32 %v244, 4294901760
      %1168 = vmatmul.mubr.f32.gmra.mrb[0].mxu0 %v1167
      %v1169 = vpop.f32.mrb[0].mxu0
      %v1170 = vadd.f32 %v1002, %v1169
      %v1171 = vpop.f32.mrb[0].mxu0
      %1172 = vmatprep.mubr.f32.mxu0 0.0
      %v1173 = vand.u32 %v247, 4294901760
      %1174 = vmatmul.mubr.f32.gmra.mrb[0].mxu0 %v1173
      %v1175 = vpop.f32.mrb[0].mxu0
      %v1176 = vadd.f32 %v1010, %v1175
      %v1177 = vpop.f32.mrb[0].mxu0
      %1178 = vmatprep.mubr.f32.mxu0 0.0
      %v1179 = vand.u32 %v250, 4294901760
      %1180 = vmatmul.mubr.f32.gmra.mrb[0].mxu0 %v1179
      %v1181 = vpop.f32.mrb[0].mxu0
      %v1182 = vadd.f32 %v1018, %v1181
      %v1183 = vpop.f32.mrb[0].mxu0
      %1184 = vdwg.mxu0
      %1185 = vmatprep.subr.mxu0 0.0
      %v1186 = vand.u32 %v254, 4294901760
      %1187 = vmatpush1.msra.mxu0 %v1186
      %1188 = vmatprep.subr.mxu0 0.0
      %1189 = vmatpush1.msra.mxu0 0.0
      %1190 = vmatprep.subr.mxu0 0.0
      %1191 = vmatpush1.msra.mxu0 0.0
      %1192 = vmatprep.subr.mxu0 0.0
      %1193 = vmatpush1.msra.mxu0 0.0
      %1194 = vmatprep.subr.mxu0 0.0
      %1195 = vmatpush1.msra.mxu0 0.0
      %1196 = vmatprep.subr.mxu0 0.0
      %1197 = vmatpush1.msra.mxu0 0.0
      %1198 = vmatprep.subr.mxu0 0.0
      %1199 = vmatpush1.msra.mxu0 0.0
      %1200 = vmatprep.subr.mxu0 0.0
      %1201 = vmatpush1.msra.mxu0 0.0
      %1202 = vmatprep.subr.mxu0 0.0
      %1203 = vmatpush1.msra.mxu0 0.0
      %1204 = vmatprep.subr.mxu0 0.0
      %1205 = vmatpush1.msra.mxu0 0.0
      %1206 = vmatprep.subr.mxu0 0.0
      %1207 = vmatpush1.msra.mxu0 0.0
      %1208 = vmatprep.subr.mxu0 0.0
      %1209 = vmatpush1.msra.mxu0 0.0
      %1210 = vmatprep.subr.mxu0 0.0
      %1211 = vmatpush1.msra.mxu0 0.0
      %1212 = vmatprep.subr.mxu0 0.0
      %1213 = vmatpush1.msra.mxu0 0.0
      %1214 = vmatprep.subr.mxu0 0.0
      %1215 = vmatpush1.msra.mxu0 0.0
      %1216 = vmatprep.subr.mxu0 0.0
      %1217 = vmatpush1.msra.mxu0 0.0
      %1218 = vmatprep.subr.mxu0 0.0
      %1219 = vmatpush1.msra.mxu0 0.0
      %1220 = vmatprep.subr.mxu0 0.0
      %1221 = vmatpush1.msra.mxu0 0.0
      %1222 = vmatprep.subr.mxu0 0.0
      %1223 = vmatpush1.msra.mxu0 0.0
      %1224 = vmatprep.subr.mxu0 0.0
      %1225 = vmatpush1.msra.mxu0 0.0
      %1226 = vmatprep.subr.mxu0 0.0
      %1227 = vmatpush1.msra.mxu0 0.0
      %1228 = vmatprep.subr.mxu0 0.0
      %1229 = vmatpush1.msra.mxu0 0.0
      %1230 = vmatprep.subr.mxu0 0.0
      %1231 = vmatpush1.msra.mxu0 0.0
      %1232 = vmatprep.subr.mxu0 0.0
      %1233 = vmatpush1.msra.mxu0 0.0
      %1234 = vmatprep.subr.mxu0 0.0
      %1235 = vmatpush1.msra.mxu0 0.0
      %1236 = vmatprep.subr.mxu0 0.0
      %1237 = vmatpush1.msra.mxu0 0.0
      %1238 = vmatprep.subr.mxu0 0.0
      %1239 = vmatpush1.msra.mxu0 0.0
      %1240 = vmatprep.subr.mxu0 0.0
      %1241 = vmatpush1.msra.mxu0 0.0
      %1242 = vmatprep.subr.mxu0 0.0
      %1243 = vmatpush1.msra.mxu0 0.0
      %1244 = vmatprep.subr.mxu0 0.0
      %1245 = vmatpush1.msra.mxu0 0.0
      %1246 = vmatprep.subr.mxu0 0.0
      %1247 = vmatpush1.msra.mxu0 0.0
      %1248 = vmatprep.subr.mxu0 0.0
      %1249 = vmatpush1.msra.mxu0 0.0
      %1250 = vmatprep.mubr.f32.mxu0 0.0
      %v1251 = vand.u32 %v205, 4294901760
      %1252 = vmatmul.mubr.f32.gmra.mrb[0].mxu0 %v1251
      %v1253 = vpop.f32.mrb[0].mxu0
      %v1254 = vadd.f32 %v1092, %v1253
      %v1255 = vpop.f32.mrb[0].mxu0
      %1256 = vmatprep.mubr.f32.mxu0 0.0
      %v1257 = vand.u32 %v208, 4294901760
      %1258 = vmatmul.mubr.f32.gmra.mrb[0].mxu0 %v1257
      %v1259 = vpop.f32.mrb[0].mxu0
      %v1260 = vadd.f32 %v1098, %v1259
      %v1261 = vpop.f32.mrb[0].mxu0
      %1262 = vmatprep.mubr.f32.mxu0 0.0
      %v1263 = vand.u32 %v211, 4294901760
      %1264 = vmatmul.mubr.f32.gmra.mrb[0].mxu0 %v1263
      %v1265 = vpop.f32.mrb[0].mxu0
      %v1266 = vadd.f32 %v1104, %v1265
      %v1267 = vpop.f32.mrb[0].mxu0
      %1268 = vmatprep.mubr.f32.mxu0 0.0
      %v1269 = vand.u32 %v214, 4294901760
      %1270 = vmatmul.mubr.f32.gmra.mrb[0].mxu0 %v1269
      %v1271 = vpop.f32.mrb[0].mxu0
      %v1272 = vadd.f32 %v1110, %v1271
      %v1273 = vpop.f32.mrb[0].mxu0
      %1274 = vmatprep.mubr.f32.mxu0 0.0
      %v1275 = vand.u32 %v217, 4294901760
      %1276 = vmatmul.mubr.f32.gmra.mrb[0].mxu0 %v1275
      %v1277 = vpop.f32.mrb[0].mxu0
      %v1278 = vadd.f32 %v1116, %v1277
      %v1279 = vpop.f32.mrb[0].mxu0
      %1280 = vmatprep.mubr.f32.mxu0 0.0
      %v1281 = vand.u32 %v220, 4294901760
      %1282 = vmatmul.mubr.f32.gmra.mrb[0].mxu0 %v1281
      %v1283 = vpop.f32.mrb[0].mxu0
      %v1284 = vadd.f32 %v1122, %v1283
      %v1285 = vpop.f32.mrb[0].mxu0
      %1286 = vmatprep.mubr.f32.mxu0 0.0
      %v1287 = vand.u32 %v223, 4294901760
      %1288 = vmatmul.mubr.f32.gmra.mrb[0].mxu0 %v1287
      %v1289 = vpop.f32.mrb[0].mxu0
      %v1290 = vadd.f32 %v1128, %v1289
      %v1291 = vpop.f32.mrb[0].mxu0
      %1292 = vmatprep.mubr.f32.mxu0 0.0
      %v1293 = vand.u32 %v226, 4294901760
      %1294 = vmatmul.mubr.f32.gmra.mrb[0].mxu0 %v1293
      %v1295 = vpop.f32.mrb[0].mxu0
      %v1296 = vadd.f32 %v1134, %v1295
      %v1297 = vpop.f32.mrb[0].mxu0
      %1298 = vmatprep.mubr.f32.mxu0 0.0
      %v1299 = vand.u32 %v229, 4294901760
      %1300 = vmatmul.mubr.f32.gmra.mrb[0].mxu0 %v1299
      %v1301 = vpop.f32.mrb[0].mxu0
      %v1302 = vadd.f32 %v1140, %v1301
      %v1303 = vpop.f32.mrb[0].mxu0
      %1304 = vmatprep.mubr.f32.mxu0 0.0
      %v1305 = vand.u32 %v232, 4294901760
      %1306 = vmatmul.mubr.f32.gmra.mrb[0].mxu0 %v1305
      %v1307 = vpop.f32.mrb[0].mxu0
      %v1308 = vadd.f32 %v1146, %v1307
      %v1309 = vpop.f32.mrb[0].mxu0
      %1310 = vmatprep.mubr.f32.mxu0 0.0
      %v1311 = vand.u32 %v235, 4294901760
      %1312 = vmatmul.mubr.f32.gmra.mrb[0].mxu0 %v1311
      %v1313 = vpop.f32.mrb[0].mxu0
      %v1314 = vadd.f32 %v1152, %v1313
      %v1315 = vpop.f32.mrb[0].mxu0
      %1316 = vmatprep.mubr.f32.mxu0 0.0
      %v1317 = vand.u32 %v238, 4294901760
      %1318 = vmatmul.mubr.f32.gmra.mrb[0].mxu0 %v1317
      %v1319 = vpop.f32.mrb[0].mxu0
      %v1320 = vadd.f32 %v1158, %v1319
      %v1321 = vpop.f32.mrb[0].mxu0
      %1322 = vmatprep.mubr.f32.mxu0 0.0
      %v1323 = vand.u32 %v241, 4294901760
      %1324 = vmatmul.mubr.f32.gmra.mrb[0].mxu0 %v1323
      %v1325 = vpop.f32.mrb[0].mxu0
      %v1326 = vadd.f32 %v1164, %v1325
      %v1327 = vpop.f32.mrb[0].mxu0
      %1328 = vmatprep.mubr.f32.mxu0 0.0
      %v1329 = vand.u32 %v244, 4294901760
      %1330 = vmatmul.mubr.f32.gmra.mrb[0].mxu0 %v1329
      %v1331 = vpop.f32.mrb[0].mxu0
      %v1332 = vadd.f32 %v1170, %v1331
      %v1333 = vpop.f32.mrb[0].mxu0
      %1334 = vmatprep.mubr.f32.mxu0 0.0
      %v1335 = vand.u32 %v247, 4294901760
      %1336 = vmatmul.mubr.f32.gmra.mrb[0].mxu0 %v1335
      %v1337 = vpop.f32.mrb[0].mxu0
      %v1338 = vadd.f32 %v1176, %v1337
      %v1339 = vpop.f32.mrb[0].mxu0
      %1340 = vmatprep.mubr.f32.mxu0 0.0
      %v1341 = vand.u32 %v250, 4294901760
      %1342 = vmatmul.mubr.f32.gmra.mrb[0].mxu0 %v1341
      %v1343 = vpop.f32.mrb[0].mxu0
      %v1344 = vadd.f32 %v1182, %v1343
      %v1345 = vpop.f32.mrb[0].mxu0
      %1346 = vdwg.mxu0
      %vm1347 = vcmask 130048
      %1348 = vst.msk [vmem:[%s177] sm:$0xff] %vm1347, %v1254
      %1349 = vst.msk [vmem:[%s177 + $0x8] sm:$0xff] %vm1347, %v1260
      %1350 = vst.msk [vmem:[%s177 + $0x20] sm:$0xff] %vm1347, %v1266
      %1351 = vst.msk [vmem:[%s177 + $0x28] sm:$0xff] %vm1347, %v1272
      %1352 = vst.msk [vmem:[%s177 + $0x40] sm:$0xff] %vm1347, %v1278
      %1353 = vst.msk [vmem:[%s177 + $0x48] sm:$0xff] %vm1347, %v1284
      %1354 = vst.msk [vmem:[%s177 + $0x60] sm:$0xff] %vm1347, %v1290
      %1355 = vst.msk [vmem:[%s177 + $0x68] sm:$0xff] %vm1347, %v1296
      %1356 = vst.msk [vmem:[%s177 + $0x80] sm:$0xff] %vm1347, %v1302
      %1357 = vst.msk [vmem:[%s177 + $0x88] sm:$0xff] %vm1347, %v1308
      %1358 = vst.msk [vmem:[%s177 + $0xa0] sm:$0xff] %vm1347, %v1314
      %1359 = vst.msk [vmem:[%s177 + $0xa8] sm:$0xff] %vm1347, %v1320
      %1360 = vst.msk [vmem:[%s177 + $0xc0] sm:$0xff] %vm1347, %v1326
      %1361 = vst.msk [vmem:[%s177 + $0xc8] sm:$0xff] %vm1347, %v1332
      %1362 = vst.msk [vmem:[%s177 + $0xe0] sm:$0xff] %vm1347, %v1338
      %1363 = vst.msk [vmem:[%s177 + $0xe8] sm:$0xff] %vm1347, %v1344
      %1380 = vrot.lane.b32.xlu0 %v1254, 112
      %v1381 = vpop.permute.xlu0 %1380
      %1382 = vrot.lane.b32.xlu0 %v1260, 112
      %v1383 = vpop.permute.xlu0 %1382
      %1384 = vrot.lane.b32.xlu0 %v1266, 112
      %v1385 = vpop.permute.xlu0 %1384
      %1386 = vrot.lane.b32.xlu0 %v1272, 112
      %v1387 = vpop.permute.xlu0 %1386
      %1388 = vrot.lane.b32.xlu0 %v1278, 112
      %v1389 = vpop.permute.xlu0 %1388
      %1390 = vrot.lane.b32.xlu0 %v1284, 112
      %v1391 = vpop.permute.xlu0 %1390
      %1392 = vrot.lane.b32.xlu0 %v1290, 112
      %v1393 = vpop.permute.xlu0 %1392
      %1394 = vrot.lane.b32.xlu0 %v1296, 112
      %v1395 = vpop.permute.xlu0 %1394
      %1396 = vrot.lane.b32.xlu0 %v1302, 112
      %v1397 = vpop.permute.xlu0 %1396
      %1398 = vrot.lane.b32.xlu0 %v1308, 112
      %v1399 = vpop.permute.xlu0 %1398
      %1400 = vrot.lane.b32.xlu0 %v1314, 112
      %v1401 = vpop.permute.xlu0 %1400
      %1402 = vrot.lane.b32.xlu0 %v1320, 112
      %v1403 = vpop.permute.xlu0 %1402
      %1404 = vrot.lane.b32.xlu0 %v1326, 112
      %v1405 = vpop.permute.xlu0 %1404
      %1406 = vrot.lane.b32.xlu0 %v1332, 112
      %v1407 = vpop.permute.xlu0 %1406
      %1408 = vrot.lane.b32.xlu0 %v1338, 112
      %v1409 = vpop.permute.xlu0 %1408
      %1410 = vrot.lane.b32.xlu0 %v1344, 112
      %v1411 = vpop.permute.xlu0 %1410
      %s1428 = scalar_lea.vmem %s177, 16
      %1429 = vst.msk [vmem:[%s1428] sm:$0xff] %vm1347, %v1381
      %1430 = vst.msk [vmem:[%s1428 + $0x8] sm:$0xff] %vm1347, %v1383
      %1431 = vst.msk [vmem:[%s1428 + $0x20] sm:$0xff] %vm1347, %v1385
      %1432 = vst.msk [vmem:[%s1428 + $0x28] sm:$0xff] %vm1347, %v1387
      %1433 = vst.msk [vmem:[%s1428 + $0x40] sm:$0xff] %vm1347, %v1389
      %1434 = vst.msk [vmem:[%s1428 + $0x48] sm:$0xff] %vm1347, %v1391
      %1435 = vst.msk [vmem:[%s1428 + $0x60] sm:$0xff] %vm1347, %v1393
      %1436 = vst.msk [vmem:[%s1428 + $0x68] sm:$0xff] %vm1347, %v1395
      %1437 = vst.msk [vmem:[%s1428 + $0x80] sm:$0xff] %vm1347, %v1397
      %1438 = vst.msk [vmem:[%s1428 + $0x88] sm:$0xff] %vm1347, %v1399
      %1439 = vst.msk [vmem:[%s1428 + $0xa0] sm:$0xff] %vm1347, %v1401
      %1440 = vst.msk [vmem:[%s1428 + $0xa8] sm:$0xff] %vm1347, %v1403
      %1441 = vst.msk [vmem:[%s1428 + $0xc0] sm:$0xff] %vm1347, %v1405
      %1442 = vst.msk [vmem:[%s1428 + $0xc8] sm:$0xff] %vm1347, %v1407
      %1443 = vst.msk [vmem:[%s1428 + $0xe0] sm:$0xff] %vm1347, %v1409
      %1444 = vst.msk [vmem:[%s1428 + $0xe8] sm:$0xff] %vm1347, %v1411
      %s1445 = smul.u32 8, %s14
      %p1446 = scmp.lt.s32.totalorder %s1445, 31
      %s1447 = scalar_select %p1446, %s1445, 31
      %s1448 = smul.addr %s1447, 4
      %s1449 = smul.addr %s1448, 8
      %s1450 = scalar_lea.vmem %s3, %s1449
      // Predicated region
      $region33: #{tpu_custom_call.1} parent=31 // pred_check
        %p1451 = pneg %p100
      $region34: #{tpu_custom_call.1} parent=31 // pred_check_branch
        %1453 = sbr.rel (%p1451) target = $region36
      $region35: #{tpu_custom_call.1} parent=31 // pred_region
        %s1454 = smul.u32 8, %s14
      $region36: #{tpu_custom_call.1} parent=31 // pred_fallthru
        _
    $region32: #{tpu_custom_call.1} parent=5 // pred_fallthru
      _
    %p1455 = scmp.le.s32.totalorder 2, %s9
    // Predicated region
    $region37: #{tpu_custom_call.1} parent=5 // pred_check
      %p1456 = pneg %p1455
    $region38: #{tpu_custom_call.1} parent=5 // pred_check_branch
      %1458 = sbr.rel (%p1456) target = $region40
    $region39: #{tpu_custom_call.1} parent=5 // pred_region
      %s1459 = ssub.s32 %s9, 2
      // Predicated region
      $region41: #{tpu_custom_call.1} parent=39 // pred_check
        %p1460 = pneg %p106
      $region42: #{tpu_custom_call.1} parent=39 // pred_check_branch
        %1462 = sbr.rel (%p1460) target = $region44
      $region43: #{tpu_custom_call.1} parent=39 // pred_region
        %s1463 = smul.u32 8, %s15
        %p1464 = scmp.lt.s32.totalorder %s1463, 31
        %s1465 = scalar_select %p1464, %s1463, 31
        %s1466 = smul.addr %s1465, 4
        %s1467 = smul.addr %s1466, 8
        %s1468 = scalar_lea.vmem %s3, %s1467
      $region44: #{tpu_custom_call.1} parent=39 // pred_fallthru
        _
    $region40: #{tpu_custom_call.1} parent=5 // pred_fallthru
      _
  $region6: #{tpu_custom_call.1} parent=0 // loop_footer
    %s13 = sadd.s32 1, %s9
  $region7: #{tpu_custom_call.1} parent=0 // loop_footer_branch
    %8 = sbr.rel target = $region3
  $region8: #{tpu_custom_call.1} parent=0 // loop_exit
    _

// kernel: tpu_custom_call.1
$region0: #{tpu_custom_call.1}
  #allocation0 [shape = 'u32[]', space=smem, size = 0x4, offset = 0x4, fixed_abs, tag = 'smem constant byte address 0x4 - core index']
  #allocation1 [shape = 'u32[144,128]{1,0:T(1,128)}', space=vmem, size = 0x12000, scoped, tag = 'internal scratch']
  %s0 = inlined_call_operand.vmem [shape: f32[32,16,4], index: 0, kind: input, shape index: {}]
  %s1 = inlined_call_operand.vmem [shape: f32[4,32], index: 1, kind: input, shape index: {}]
  %s2 = inlined_call_operand.vmem [shape: f32[1,32], index: 2, kind: input, shape index: {}]
  %s3 = inlined_call_operand.vmem [shape: f32[32,2,16,16], index: 3, kind: output, shape index: {}]
  %s4 = sld [smem:[#allocation0]]
  $region45: #{tpu_custom_call.1} parent=0
    _
  %s6 = ssub.s32 1, %s4
  %s7 = scalar_select 0, %s6, %s4
  loop: start=0, step=1, limit=6
  $region2: #{tpu_custom_call.1} parent=0 // loop_pre_header
    _
  $region3: #{tpu_custom_call.1} parent=0 // loop_header
    %s9 = sphi 0, %s13
    %p10 = scmp.ge.s32.totalorder %s9, 6
    %s19 = sphi 0, %s21
    %s22 = sphi 0, %s19
    %s23 = sphi 0, %s22
    %s39 = sphi 0, %s23
    %s43 = sphi 0, %s43
    %s45 = sphi 0, %s43
    %s46 = sphi 0, %s45
    %s60 = sphi 0, %s46
    %s64 = sphi 0, %s64
    %s66 = sphi 0, %s64
    %s67 = sphi 0, %s66
    %s81 = sphi 0, %s67
    %s87 = sphi 0, %s89
    %s90 = sphi 0, %s87
    %s91 = sphi 0, %s90
    %s107 = sphi 0, %s91
  $region4: #{tpu_custom_call.1} parent=0 // loop_header_branch
    %12 = sbr.rel (%p10) target = $region8
  $region5: #{tpu_custom_call.1} parent=0 // loop_body
    %s14 = ssub.s32 %s9, 1
    %s15 = ssub.s32 %s9, 2
    %s16 = sadd.s32 %s9, 1
    %s17 = ssub.s32 %s9, %s16
    %p18 = scmp.eq.s32.totalorder %s17, 0
    %s20 = sadd.s32 %s19, 1
    %s21 = scalar_select %p18, %s19, %s20
    %p24 = pneg %p18
    %p25 = scmp.eq.s32.totalorder %s9, 3
    %p26 = por %p24, %p25
    %p27 = scmp.ne.s32.totalorder %s19, %s22
    %p28 = scmp.eq.s32.totalorder %s9, 0
    %p29 = por %p27, %p28
    %p30 = scmp.ne.s32.totalorder %s19, %s22
    %p31 = scmp.eq.s32.totalorder %s14, 3
    %p32 = por %p30, %p31
    %p33 = scmp.ne.s32.totalorder %s22, %s23
    %p34 = scmp.eq.s32.totalorder %s14, 0
    %p35 = por %p33, %p34
    %p36 = scmp.ne.s32.totalorder %s22, %s23
    %p37 = scmp.eq.s32.totalorder %s15, 3
    %p38 = por %p36, %p37
    %p40 = scmp.ne.s32.totalorder %s23, %s39
    %p41 = scmp.eq.s32.totalorder %s15, 0
    %p42 = por %p40, %p41
    %s44 = sadd.s32 %s43, 1
    %p47 = scmp.eq.s32.totalorder %s9, 3
    %p48 = scmp.ne.s32.totalorder %s43, %s45
    %p49 = scmp.eq.s32.totalorder %s9, 0
    %p50 = por %p48, %p49
    %p51 = scmp.ne.s32.totalorder %s43, %s45
    %p52 = scmp.eq.s32.totalorder %s14, 3
    %p53 = por %p51, %p52
    %p54 = scmp.ne.s32.totalorder %s45, %s46
    %p55 = scmp.eq.s32.totalorder %s14, 0
    %p56 = por %p54, %p55
    %p57 = scmp.ne.s32.totalorder %s45, %s46
    %p58 = scmp.eq.s32.totalorder %s15, 3
    %p59 = por %p57, %p58
    %p61 = scmp.ne.s32.totalorder %s46, %s60
    %p62 = scmp.eq.s32.totalorder %s15, 0
    %p63 = por %p61, %p62
    %s65 = sadd.s32 %s64, 1
    %p68 = scmp.eq.s32.totalorder %s9, 3
    %p69 = scmp.ne.s32.totalorder %s64, %s66
    %p70 = scmp.eq.s32.totalorder %s9, 0
    %p71 = por %p69, %p70
    %p72 = scmp.ne.s32.totalorder %s64, %s66
    %p73 = scmp.eq.s32.totalorder %s14, 3
    %p74 = por %p72, %p73
    %p75 = scmp.ne.s32.totalorder %s66, %s67
    %p76 = scmp.eq.s32.totalorder %s14, 0
    %p77 = por %p75, %p76
    %p78 = scmp.ne.s32.totalorder %s66, %s67
    %p79 = scmp.eq.s32.totalorder %s15, 3
    %p80 = por %p78, %p79
    %p82 = scmp.ne.s32.totalorder %s67, %s81
    %p83 = scmp.eq.s32.totalorder %s15, 0
    %p84 = por %p82, %p83
    %s85 = ssub.s32 %s9, %s16
    %p86 = scmp.eq.s32.totalorder %s85, 0
    %s88 = sadd.s32 %s87, 1
    %s89 = scalar_select %p86, %s87, %s88
    %p92 = pneg %p86
    %p93 = scmp.eq.s32.totalorder %s9, 3
    %p94 = por %p92, %p93
    %p95 = scmp.ne.s32.totalorder %s87, %s90
    %p96 = scmp.eq.s32.totalorder %s9, 0
    %p97 = por %p95, %p96
    %p98 = scmp.ne.s32.totalorder %s87, %s90
    %p99 = scmp.eq.s32.totalorder %s14, 3
    %p100 = por %p98, %p99
    %p101 = scmp.ne.s32.totalorder %s90, %s91
    %p102 = scmp.eq.s32.totalorder %s14, 0
    %p103 = por %p101, %p102
    %p104 = scmp.ne.s32.totalorder %s90, %s91
    %p105 = scmp.eq.s32.totalorder %s15, 3
    %p106 = por %p104, %p105
    %p108 = scmp.ne.s32.totalorder %s91, %s107
    %p109 = scmp.eq.s32.totalorder %s15, 0
    %p110 = por %p108, %p109
    %p111 = scmp.le.s32.totalorder 1, %s9
    %p112 = scmp.lt.s32.totalorder %s9, 5
    %p113 = pnand %p111, %p112
    %p114 = pneg %p113
    // Predicated region
    $region9: #{tpu_custom_call.1} parent=5 // pred_check
      _
    $region10: #{tpu_custom_call.1} parent=5 // pred_check_branch
      %116 = sbr.rel (%p113) target = $region12
    $region11: #{tpu_custom_call.1} parent=5 // pred_region
      %s117 = ssub.s32 %s9, 1
      // Predicated region
      $region13: #{tpu_custom_call.1} parent=11 // pred_check
        %p118 = pneg %p56
      $region14: #{tpu_custom_call.1} parent=11 // pred_check_branch
        %120 = sbr.rel (%p118) target = $region16
      $region15: #{tpu_custom_call.1} parent=11 // pred_region
        _
      $region16: #{tpu_custom_call.1} parent=11 // pred_fallthru
        _
      // Predicated region
      $region17: #{tpu_custom_call.1} parent=11 // pred_check
        %p121 = pneg %p77
      $region18: #{tpu_custom_call.1} parent=11 // pred_check_branch
        %123 = sbr.rel (%p121) target = $region20
      $region19: #{tpu_custom_call.1} parent=11 // pred_region
        _
      $region20: #{tpu_custom_call.1} parent=11 // pred_fallthru
        _
    $region12: #{tpu_custom_call.1} parent=5 // pred_fallthru
      _
    %p124 = scmp.lt.s32.totalorder %s9, 4
    // Predicated region
    $region21: #{tpu_custom_call.1} parent=5 // pred_check
      %p125 = pneg %p124
    $region22: #{tpu_custom_call.1} parent=5 // pred_check_branch
      %127 = sbr.rel (%p125) target = $region24
    $region23: #{tpu_custom_call.1} parent=5 // pred_region
      // Predicated region
      $region25: #{tpu_custom_call.1} parent=23 // pred_check
        %p128 = pneg %p29
      $region26: #{tpu_custom_call.1} parent=23 // pred_check_branch
        %130 = sbr.rel (%p128) target = $region28
      $region27: #{tpu_custom_call.1} parent=23 // pred_region
        %s131 = smul.u32 8, %s9
        %p132 = scmp.lt.s32.totalorder %s131, 31
        %s133 = scalar_select %p132, %s131, 31
        %s134 = smul.addr %s133, 2
        %s135 = smul.addr %s134, 8
        %s136 = scalar_lea.vmem %s0, %s135
        %s137 = smul.u32 8, %s9
      $region28: #{tpu_custom_call.1} parent=23 // pred_fallthru
        _
    $region24: #{tpu_custom_call.1} parent=5 // pred_fallthru
      _
    %p138 = scmp.le.s32.totalorder 1, %s9
    %p139 = scmp.lt.s32.totalorder %s9, 5
    %p140 = pnand %p138, %p139
    %p141 = pneg %p140
    // Predicated region
    $region29: #{tpu_custom_call.1} parent=5 // pred_check
      _
    $region30: #{tpu_custom_call.1} parent=5 // pred_check_branch
      %143 = sbr.rel (%p140) target = $region32
    $region31: #{tpu_custom_call.1} parent=5 // pred_region
      %s144 = ssub.s32 %s9, 1
      %s145 = smul.u32 8, %s14
      %p146 = scmp.lt.s32.totalorder %s145, 31
      %s147 = scalar_select %p146, %s145, 31
      %s148 = smul.addr %s147, 2
      %s149 = smul.addr %s148, 8
      %s150 = scalar_lea.vmem %s0, %s149
      %p151 = pneg %p35
      %p152 = pneg %p32
      %p153 = pneg %p56
      %p154 = pneg %p53
      %p155 = pneg %p77
      %p156 = pneg %p74
      %p157 = pneg %p103
      %p158 = pneg %p100
      %s159 = smul.u32 8, %s14
      %p160 = scmp.lt.s32.totalorder %s159, 31
      %s161 = scalar_select %p160, %s159, 31
      %s162 = smul.addr %s161, 4
      %s163 = smul.addr %s162, 8
      %s164 = scalar_lea.vmem %s3, %s163
      %s165 = smul.u32 8, %s14
      %p166 = scmp.lt.s32.totalorder %s165, 31
      %s167 = scalar_select %p166, %s165, 31
      %s168 = smul.addr %s167, 2
      %s169 = smul.addr %s168, 8
      %s170 = scalar_lea.vmem %s0, %s169
      %s171 = smul.u32 8, %s14
      %s172 = smul.u32 8, %s14
      %p173 = scmp.lt.s32.totalorder %s172, 31
      %s174 = scalar_select %p173, %s172, 31
      %s175 = smul.addr %s174, 4
      %s176 = smul.addr %s175, 8
      %s177 = scalar_lea.vmem %s3, %s176
      %s178 = smul.u32 8, %s14
      %v179 = vld [vmem:[%s170] sm:$0xff]
      %v180 = vld [vmem:[%s170 + $0x8] sm:$0xff]
      %v181 = vld [vmem:[%s170 + $0x10] sm:$0xff]
      %v182 = vld [vmem:[%s170 + $0x18] sm:$0xff]
      %v183 = vld [vmem:[%s170 + $0x20] sm:$0xff]
      %v184 = vld [vmem:[%s170 + $0x28] sm:$0xff]
      %v185 = vld [vmem:[%s170 + $0x30] sm:$0xff]
      %v186 = vld [vmem:[%s170 + $0x38] sm:$0xff]
      %v187 = vld [vmem:[%s170 + $0x40] sm:$0xff]
      %v188 = vld [vmem:[%s170 + $0x48] sm:$0xff]
      %v189 = vld [vmem:[%s170 + $0x50] sm:$0xff]
      %v190 = vld [vmem:[%s170 + $0x58] sm:$0xff]
      %v191 = vld [vmem:[%s170 + $0x60] sm:$0xff]
      %v192 = vld [vmem:[%s170 + $0x68] sm:$0xff]
      %v193 = vld [vmem:[%s170 + $0x70] sm:$0xff]
      %v194 = vld [vmem:[%s170 + $0x78] sm:$0xff]
      %v195 = vld [vmem:[%s1] sm:$0xf]
      %v196 = vld [vmem:[%s2] sm:$0x1]
      %v198 = vlaneseq
      %v199 = vshrl.u32 %v198, 7
      %v200 = vsub.s32 0, %v199
      %v201 = vrot.slane %v196, %v200
      %vm203 = vcmask 31744
      %v205 = vsel %vm203, %v179, 0
      %v208 = vsel %vm203, %v180, 0
      %v211 = vsel %vm203, %v181, 0
      %v214 = vsel %vm203, %v182, 0
      %v217 = vsel %vm203, %v183, 0
      %v220 = vsel %vm203, %v184, 0
      %v223 = vsel %vm203, %v185, 0
      %v226 = vsel %vm203, %v186, 0
      %v229 = vsel %vm203, %v187, 0
      %v232 = vsel %vm203, %v188, 0
      %v235 = vsel %vm203, %v189, 0
      %v238 = vsel %vm203, %v190, 0
      %v241 = vsel %vm203, %v191, 0
      %v244 = vsel %vm203, %v192, 0
      %v247 = vsel %vm203, %v193, 0
      %v250 = vsel %vm203, %v194, 0
      %vm252 = vcmask 1043456
      %v254 = vsel %vm252, %v195, 0
      %256 = vmatprep.subr.mxu0 0.0
      %v257 = vand.u32 %v254, 4294901760
      %258 = vmatpush1.msra.mxu0 %v257
      %259 = vmatprep.subr.mxu0 0.0
      %260 = vmatpush1.msra.mxu0 0.0
      %261 = vmatprep.subr.mxu0 0.0
      %262 = vmatpush1.msra.mxu0 0.0
      %263 = vmatprep.subr.mxu0 0.0
      %264 = vmatpush1.msra.mxu0 0.0
      %265 = vmatprep.subr.mxu0 0.0
      %266 = vmatpush1.msra.mxu0 0.0
      %267 = vmatprep.subr.mxu0 0.0
      %268 = vmatpush1.msra.mxu0 0.0
      %269 = vmatprep.subr.mxu0 0.0
      %270 = vmatpush1.msra.mxu0 0.0
      %271 = vmatprep.subr.mxu0 0.0
      %272 = vmatpush1.msra.mxu0 0.0
      %273 = vmatprep.subr.mxu0 0.0
      %274 = vmatpush1.msra.mxu0 0.0
      %275 = vmatprep.subr.mxu0 0.0
      %276 = vmatpush1.msra.mxu0 0.0
      %277 = vmatprep.subr.mxu0 0.0
      %278 = vmatpush1.msra.mxu0 0.0
      %279 = vmatprep.subr.mxu0 0.0
      %280 = vmatpush1.msra.mxu0 0.0
      %281 = vmatprep.subr.mxu0 0.0
      %282 = vmatpush1.msra.mxu0 0.0
      %283 = vmatprep.subr.mxu0 0.0
      %284 = vmatpush1.msra.mxu0 0.0
      %285 = vmatprep.subr.mxu0 0.0
      %286 = vmatpush1.msra.mxu0 0.0
      %287 = vmatprep.subr.mxu0 0.0
      %288 = vmatpush1.msra.mxu0 0.0
      %289 = vmatprep.subr.mxu0 0.0
      %290 = vmatpush1.msra.mxu0 0.0
      %291 = vmatprep.subr.mxu0 0.0
      %292 = vmatpush1.msra.mxu0 0.0
      %293 = vmatprep.subr.mxu0 0.0
      %294 = vmatpush1.msra.mxu0 0.0
      %295 = vmatprep.subr.mxu0 0.0
      %296 = vmatpush1.msra.mxu0 0.0
      %297 = vmatprep.subr.mxu0 0.0
      %298 = vmatpush1.msra.mxu0 0.0
      %299 = vmatprep.subr.mxu0 0.0
      %300 = vmatpush1.msra.mxu0 0.0
      %301 = vmatprep.subr.mxu0 0.0
      %302 = vmatpush1.msra.mxu0 0.0
      %303 = vmatprep.subr.mxu0 0.0
      %304 = vmatpush1.msra.mxu0 0.0
      %305 = vmatprep.subr.mxu0 0.0
      %306 = vmatpush1.msra.mxu0 0.0
      %307 = vmatprep.subr.mxu0 0.0
      %308 = vmatpush1.msra.mxu0 0.0
      %309 = vmatprep.subr.mxu0 0.0
      %310 = vmatpush1.msra.mxu0 0.0
      %311 = vmatprep.subr.mxu0 0.0
      %312 = vmatpush1.msra.mxu0 0.0
      %313 = vmatprep.subr.mxu0 0.0
      %314 = vmatpush1.msra.mxu0 0.0
      %315 = vmatprep.subr.mxu0 0.0
      %316 = vmatpush1.msra.mxu0 0.0
      %317 = vmatprep.subr.mxu0 0.0
      %318 = vmatpush1.msra.mxu0 0.0
      %319 = vmatprep.subr.mxu0 0.0
      %320 = vmatpush1.msra.mxu0 0.0
      %321 = vmatprep.mubr.f32.mxu0 0.0
      %v322 = vand.u32 %v205, 4294901760
      %v323 = vsub.f32 %v205, %v322
      %v324 = vand.u32 %v323, 4294901760
      %v325 = vsub.f32 %v323, %v324
      %v326 = vand.u32 %v325, 4294901760
      %327 = vmatmul.mubr.f32.gmra.mrb[0].mxu0 %v326
      %v328 = vpop.f32.mrb[0].mxu0
      %v329 = vadd.f32 %v201, %v328
      %v330 = vpop.f32.mrb[0].mxu0
      %331 = vmatprep.mubr.f32.mxu0 0.0
      %v332 = vand.u32 %v208, 4294901760
      %v333 = vsub.f32 %v208, %v332
      %v334 = vand.u32 %v333, 4294901760
      %v335 = vsub.f32 %v333, %v334
      %v336 = vand.u32 %v335, 4294901760
      %337 = vmatmul.mubr.f32.gmra.mrb[0].mxu0 %v336
      %v338 = vpop.f32.mrb[0].mxu0
      %v339 = vadd.f32 %v201, %v338
      %v340 = vpop.f32.mrb[0].mxu0
      %341 = vmatprep.mubr.f32.mxu0 0.0
      %v342 = vand.u32 %v211, 4294901760
      %v343 = vsub.f32 %v211, %v342
      %v344 = vand.u32 %v343, 4294901760
      %v345 = vsub.f32 %v343, %v344
      %v346 = vand.u32 %v345, 4294901760
      %347 = vmatmul.mubr.f32.gmra.mrb[0].mxu0 %v346
      %v348 = vpop.f32.mrb[0].mxu0
      %v349 = vadd.f32 %v201, %v348
      %v350 = vpop.f32.mrb[0].mxu0
      %351 = vmatprep.mubr.f32.mxu0 0.0
      %v352 = vand.u32 %v214, 4294901760
      %v353 = vsub.f32 %v214, %v352
      %v354 = vand.u32 %v353, 4294901760
      %v355 = vsub.f32 %v353, %v354
      %v356 = vand.u32 %v355, 4294901760
      %357 = vmatmul.mubr.f32.gmra.mrb[0].mxu0 %v356
      %v358 = vpop.f32.mrb[0].mxu0
      %v359 = vadd.f32 %v201, %v358
      %v360 = vpop.f32.mrb[0].mxu0
      %361 = vmatprep.mubr.f32.mxu0 0.0
      %v362 = vand.u32 %v217, 4294901760
      %v363 = vsub.f32 %v217, %v362
      %v364 = vand.u32 %v363, 4294901760
      %v365 = vsub.f32 %v363, %v364
      %v366 = vand.u32 %v365, 4294901760
      %367 = vmatmul.mubr.f32.gmra.mrb[0].mxu0 %v366
      %v368 = vpop.f32.mrb[0].mxu0
      %v369 = vadd.f32 %v201, %v368
      %v370 = vpop.f32.mrb[0].mxu0
      %371 = vmatprep.mubr.f32.mxu0 0.0
      %v372 = vand.u32 %v220, 4294901760
      %v373 = vsub.f32 %v220, %v372
      %v374 = vand.u32 %v373, 4294901760
      %v375 = vsub.f32 %v373, %v374
      %v376 = vand.u32 %v375, 4294901760
      %377 = vmatmul.mubr.f32.gmra.mrb[0].mxu0 %v376
      %v378 = vpop.f32.mrb[0].mxu0
      %v379 = vadd.f32 %v201, %v378
      %v380 = vpop.f32.mrb[0].mxu0
      %381 = vmatprep.mubr.f32.mxu0 0.0
      %v382 = vand.u32 %v223, 4294901760
      %v383 = vsub.f32 %v223, %v382
      %v384 = vand.u32 %v383, 4294901760
      %v385 = vsub.f32 %v383, %v384
      %v386 = vand.u32 %v385, 4294901760
      %387 = vmatmul.mubr.f32.gmra.mrb[0].mxu0 %v386
      %v388 = vpop.f32.mrb[0].mxu0
      %v389 = vadd.f32 %v201, %v388
      %v390 = vpop.f32.mrb[0].mxu0
      %391 = vmatprep.mubr.f32.mxu0 0.0
      %v392 = vand.u32 %v226, 4294901760
      %v393 = vsub.f32 %v226, %v392
      %v394 = vand.u32 %v393, 4294901760
      %v395 = vsub.f32 %v393, %v394
      %v396 = vand.u32 %v395, 4294901760
      %397 = vmatmul.mubr.f32.gmra.mrb[0].mxu0 %v396
      %v398 = vpop.f32.mrb[0].mxu0
      %v399 = vadd.f32 %v201, %v398
      %v400 = vpop.f32.mrb[0].mxu0
      %401 = vmatprep.mubr.f32.mxu0 0.0
      %v402 = vand.u32 %v229, 4294901760
      %v403 = vsub.f32 %v229, %v402
      %v404 = vand.u32 %v403, 4294901760
      %v405 = vsub.f32 %v403, %v404
      %v406 = vand.u32 %v405, 4294901760
      %407 = vmatmul.mubr.f32.gmra.mrb[0].mxu0 %v406
      %v408 = vpop.f32.mrb[0].mxu0
      %v409 = vadd.f32 %v201, %v408
      %v410 = vpop.f32.mrb[0].mxu0
      %411 = vmatprep.mubr.f32.mxu0 0.0
      %v412 = vand.u32 %v232, 4294901760
      %v413 = vsub.f32 %v232, %v412
      %v414 = vand.u32 %v413, 4294901760
      %v415 = vsub.f32 %v413, %v414
      %v416 = vand.u32 %v415, 4294901760
      %417 = vmatmul.mubr.f32.gmra.mrb[0].mxu0 %v416
      %v418 = vpop.f32.mrb[0].mxu0
      %v419 = vadd.f32 %v201, %v418
      %v420 = vpop.f32.mrb[0].mxu0
      %421 = vmatprep.mubr.f32.mxu0 0.0
      %v422 = vand.u32 %v235, 4294901760
      %v423 = vsub.f32 %v235, %v422
      %v424 = vand.u32 %v423, 4294901760
      %v425 = vsub.f32 %v423, %v424
      %v426 = vand.u32 %v425, 4294901760
      %427 = vmatmul.mubr.f32.gmra.mrb[0].mxu0 %v426
      %v428 = vpop.f32.mrb[0].mxu0
      %v429 = vadd.f32 %v201, %v428
      %v430 = vpop.f32.mrb[0].mxu0
      %431 = vmatprep.mubr.f32.mxu0 0.0
      %v432 = vand.u32 %v238, 4294901760
      %v433 = vsub.f32 %v238, %v432
      %v434 = vand.u32 %v433, 4294901760
      %v435 = vsub.f32 %v433, %v434
      %v436 = vand.u32 %v435, 4294901760
      %437 = vmatmul.mubr.f32.gmra.mrb[0].mxu0 %v436
      %v438 = vpop.f32.mrb[0].mxu0
      %v439 = vadd.f32 %v201, %v438
      %v440 = vpop.f32.mrb[0].mxu0
      %441 = vmatprep.mubr.f32.mxu0 0.0
      %v442 = vand.u32 %v241, 4294901760
      %v443 = vsub.f32 %v241, %v442
      %v444 = vand.u32 %v443, 4294901760
      %v445 = vsub.f32 %v443, %v444
      %v446 = vand.u32 %v445, 4294901760
      %447 = vmatmul.mubr.f32.gmra.mrb[0].mxu0 %v446
      %v448 = vpop.f32.mrb[0].mxu0
      %v449 = vadd.f32 %v201, %v448
      %v450 = vpop.f32.mrb[0].mxu0
      %451 = vmatprep.mubr.f32.mxu0 0.0
      %v452 = vand.u32 %v244, 4294901760
      %v453 = vsub.f32 %v244, %v452
      %v454 = vand.u32 %v453, 4294901760
      %v455 = vsub.f32 %v453, %v454
      %v456 = vand.u32 %v455, 4294901760
      %457 = vmatmul.mubr.f32.gmra.mrb[0].mxu0 %v456
      %v458 = vpop.f32.mrb[0].mxu0
      %v459 = vadd.f32 %v201, %v458
      %v460 = vpop.f32.mrb[0].mxu0
      %461 = vmatprep.mubr.f32.mxu0 0.0
      %v462 = vand.u32 %v247, 4294901760
      %v463 = vsub.f32 %v247, %v462
      %v464 = vand.u32 %v463, 4294901760
      %v465 = vsub.f32 %v463, %v464
      %v466 = vand.u32 %v465, 4294901760
      %467 = vmatmul.mubr.f32.gmra.mrb[0].mxu0 %v466
      %v468 = vpop.f32.mrb[0].mxu0
      %v469 = vadd.f32 %v201, %v468
      %v470 = vpop.f32.mrb[0].mxu0
      %471 = vmatprep.mubr.f32.mxu0 0.0
      %v472 = vand.u32 %v250, 4294901760
      %v473 = vsub.f32 %v250, %v472
      %v474 = vand.u32 %v473, 4294901760
      %v475 = vsub.f32 %v473, %v474
      %v476 = vand.u32 %v475, 4294901760
      %477 = vmatmul.mubr.f32.gmra.mrb[0].mxu0 %v476
      %v478 = vpop.f32.mrb[0].mxu0
      %v479 = vadd.f32 %v201, %v478
      %v480 = vpop.f32.mrb[0].mxu0
      %481 = vdwg.mxu0
      %482 = vmatprep.subr.mxu0 0.0
      %v483 = vand.u32 %v254, 4294901760
      %v484 = vsub.f32 %v254, %v483
      %v485 = vand.u32 %v484, 4294901760
      %v486 = vsub.f32 %v484, %v485
      %v487 = vand.u32 %v486, 4294901760
      %488 = vmatpush1.msra.mxu0 %v487
      %489 = vmatprep.subr.mxu0 0.0
      %490 = vmatpush1.msra.mxu0 0.0
      %491 = vmatprep.subr.mxu0 0.0
      %492 = vmatpush1.msra.mxu0 0.0
      %493 = vmatprep.subr.mxu0 0.0
      %494 = vmatpush1.msra.mxu0 0.0
      %495 = vmatprep.subr.mxu0 0.0
      %496 = vmatpush1.msra.mxu0 0.0
      %497 = vmatprep.subr.mxu0 0.0
      %498 = vmatpush1.msra.mxu0 0.0
      %499 = vmatprep.subr.mxu0 0.0
      %500 = vmatpush1.msra.mxu0 0.0
      %501 = vmatprep.subr.mxu0 0.0
      %502 = vmatpush1.msra.mxu0 0.0
      %503 = vmatprep.subr.mxu0 0.0
      %504 = vmatpush1.msra.mxu0 0.0
      %505 = vmatprep.subr.mxu0 0.0
      %506 = vmatpush1.msra.mxu0 0.0
      %507 = vmatprep.subr.mxu0 0.0
      %508 = vmatpush1.msra.mxu0 0.0
      %509 = vmatprep.subr.mxu0 0.0
      %510 = vmatpush1.msra.mxu0 0.0
      %511 = vmatprep.subr.mxu0 0.0
      %512 = vmatpush1.msra.mxu0 0.0
      %513 = vmatprep.subr.mxu0 0.0
      %514 = vmatpush1.msra.mxu0 0.0
      %515 = vmatprep.subr.mxu0 0.0
      %516 = vmatpush1.msra.mxu0 0.0
      %517 = vmatprep.subr.mxu0 0.0
      %518 = vmatpush1.msra.mxu0 0.0
      %519 = vmatprep.subr.mxu0 0.0
      %520 = vmatpush1.msra.mxu0 0.0
      %521 = vmatprep.subr.mxu0 0.0
      %522 = vmatpush1.msra.mxu0 0.0
      %523 = vmatprep.subr.mxu0 0.0
      %524 = vmatpush1.msra.mxu0 0.0
      %525 = vmatprep.subr.mxu0 0.0
      %526 = vmatpush1.msra.mxu0 0.0
      %527 = vmatprep.subr.mxu0 0.0
      %528 = vmatpush1.msra.mxu0 0.0
      %529 = vmatprep.subr.mxu0 0.0
      %530 = vmatpush1.msra.mxu0 0.0
      %531 = vmatprep.subr.mxu0 0.0
      %532 = vmatpush1.msra.mxu0 0.0
      %533 = vmatprep.subr.mxu0 0.0
      %534 = vmatpush1.msra.mxu0 0.0
      %535 = vmatprep.subr.mxu0 0.0
      %536 = vmatpush1.msra.mxu0 0.0
      %537 = vmatprep.subr.mxu0 0.0
      %538 = vmatpush1.msra.mxu0 0.0
      %539 = vmatprep.subr.mxu0 0.0
      %540 = vmatpush1.msra.mxu0 0.0
      %541 = vmatprep.subr.mxu0 0.0
      %542 = vmatpush1.msra.mxu0 0.0
      %543 = vmatprep.subr.mxu0 0.0
      %544 = vmatpush1.msra.mxu0 0.0
      %545 = vmatprep.subr.mxu0 0.0
      %546 = vmatpush1.msra.mxu0 0.0
      %547 = vmatprep.subr.mxu0 0.0
      %548 = vmatpush1.msra.mxu0 0.0
      %549 = vmatprep.subr.mxu0 0.0
      %550 = vmatpush1.msra.mxu0 0.0
      %551 = vmatprep.mubr.f32.mxu0 0.0
      %v552 = vand.u32 %v205, 4294901760
      %553 = vmatmul.mubr.f32.gmra.mrb[0].mxu0 %v552
      %v554 = vpop.f32.mrb[0].mxu0
      %v555 = vadd.f32 %v329, %v554
      %v556 = vpop.f32.mrb[0].mxu0
      %557 = vmatprep.mubr.f32.mxu0 0.0
      %v558 = vand.u32 %v208, 4294901760
      %559 = vmatmul.mubr.f32.gmra.mrb[0].mxu0 %v558
      %v560 = vpop.f32.mrb[0].mxu0
      %v561 = vadd.f32 %v339, %v560
      %v562 = vpop.f32.mrb[0].mxu0
      %563 = vmatprep.mubr.f32.mxu0 0.0
      %v564 = vand.u32 %v211, 4294901760
      %565 = vmatmul.mubr.f32.gmra.mrb[0].mxu0 %v564
      %v566 = vpop.f32.mrb[0].mxu0
      %v567 = vadd.f32 %v349, %v566
      %v568 = vpop.f32.mrb[0].mxu0
      %569 = vmatprep.mubr.f32.mxu0 0.0
      %v570 = vand.u32 %v214, 4294901760
      %571 = vmatmul.mubr.f32.gmra.mrb[0].mxu0 %v570
      %v572 = vpop.f32.mrb[0].mxu0
      %v573 = vadd.f32 %v359, %v572
      %v574 = vpop.f32.mrb[0].mxu0
      %575 = vmatprep.mubr.f32.mxu0 0.0
      %v576 = vand.u32 %v217, 4294901760
      %577 = vmatmul.mubr.f32.gmra.mrb[0].mxu0 %v576
      %v578 = vpop.f32.mrb[0].mxu0
      %v579 = vadd.f32 %v369, %v578
      %v580 = vpop.f32.mrb[0].mxu0
      %581 = vmatprep.mubr.f32.mxu0 0.0
      %v582 = vand.u32 %v220, 4294901760
      %583 = vmatmul.mubr.f32.gmra.mrb[0].mxu0 %v582
      %v584 = vpop.f32.mrb[0].mxu0
      %v585 = vadd.f32 %v379, %v584
      %v586 = vpop.f32.mrb[0].mxu0
      %587 = vmatprep.mubr.f32.mxu0 0.0
      %v588 = vand.u32 %v223, 4294901760
      %589 = vmatmul.mubr.f32.gmra.mrb[0].mxu0 %v588
      %v590 = vpop.f32.mrb[0].mxu0
      %v591 = vadd.f32 %v389, %v590
      %v592 = vpop.f32.mrb[0].mxu0
      %593 = vmatprep.mubr.f32.mxu0 0.0
      %v594 = vand.u32 %v226, 4294901760
      %595 = vmatmul.mubr.f32.gmra.mrb[0].mxu0 %v594
      %v596 = vpop.f32.mrb[0].mxu0
      %v597 = vadd.f32 %v399, %v596
      %v598 = vpop.f32.mrb[0].mxu0
      %599 = vmatprep.mubr.f32.mxu0 0.0
      %v600 = vand.u32 %v229, 4294901760
      %601 = vmatmul.mubr.f32.gmra.mrb[0].mxu0 %v600
      %v602 = vpop.f32.mrb[0].mxu0
      %v603 = vadd.f32 %v409, %v602
      %v604 = vpop.f32.mrb[0].mxu0
      %605 = vmatprep.mubr.f32.mxu0 0.0
      %v606 = vand.u32 %v232, 4294901760
      %607 = vmatmul.mubr.f32.gmra.mrb[0].mxu0 %v606
      %v608 = vpop.f32.mrb[0].mxu0
      %v609 = vadd.f32 %v419, %v608
      %v610 = vpop.f32.mrb[0].mxu0
      %611 = vmatprep.mubr.f32.mxu0 0.0
      %v612 = vand.u32 %v235, 4294901760
      %613 = vmatmul.mubr.f32.gmra.mrb[0].mxu0 %v612
      %v614 = vpop.f32.mrb[0].mxu0
      %v615 = vadd.f32 %v429, %v614
      %v616 = vpop.f32.mrb[0].mxu0
      %617 = vmatprep.mubr.f32.mxu0 0.0
      %v618 = vand.u32 %v238, 4294901760
      %619 = vmatmul.mubr.f32.gmra.mrb[0].mxu0 %v618
      %v620 = vpop.f32.mrb[0].mxu0
      %v621 = vadd.f32 %v439, %v620
      %v622 = vpop.f32.mrb[0].mxu0
      %623 = vmatprep.mubr.f32.mxu0 0.0
      %v624 = vand.u32 %v241, 4294901760
      %625 = vmatmul.mubr.f32.gmra.mrb[0].mxu0 %v624
      %v626 = vpop.f32.mrb[0].mxu0
      %v627 = vadd.f32 %v449, %v626
      %v628 = vpop.f32.mrb[0].mxu0
      %629 = vmatprep.mubr.f32.mxu0 0.0
      %v630 = vand.u32 %v244, 4294901760
      %631 = vmatmul.mubr.f32.gmra.mrb[0].mxu0 %v630
      %v632 = vpop.f32.mrb[0].mxu0
      %v633 = vadd.f32 %v459, %v632
      %v634 = vpop.f32.mrb[0].mxu0
      %635 = vmatprep.mubr.f32.mxu0 0.0
      %v636 = vand.u32 %v247, 4294901760
      %637 = vmatmul.mubr.f32.gmra.mrb[0].mxu0 %v636
      %v638 = vpop.f32.mrb[0].mxu0
      %v639 = vadd.f32 %v469, %v638
      %v640 = vpop.f32.mrb[0].mxu0
      %641 = vmatprep.mubr.f32.mxu0 0.0
      %v642 = vand.u32 %v250, 4294901760
      %643 = vmatmul.mubr.f32.gmra.mrb[0].mxu0 %v642
      %v644 = vpop.f32.mrb[0].mxu0
      %v645 = vadd.f32 %v479, %v644
      %v646 = vpop.f32.mrb[0].mxu0
      %647 = vdwg.mxu0
      %648 = vmatprep.subr.mxu0 0.0
      %v649 = vand.u32 %v254, 4294901760
      %v650 = vsub.f32 %v254, %v649
      %651 = vmatpush1.msra.mxu0 %v650
      %652 = vmatprep.subr.mxu0 0.0
      %653 = vmatpush1.msra.mxu0 0.0
      %654 = vmatprep.subr.mxu0 0.0
      %655 = vmatpush1.msra.mxu0 0.0
      %656 = vmatprep.subr.mxu0 0.0
      %657 = vmatpush1.msra.mxu0 0.0
      %658 = vmatprep.subr.mxu0 0.0
      %659 = vmatpush1.msra.mxu0 0.0
      %660 = vmatprep.subr.mxu0 0.0
      %661 = vmatpush1.msra.mxu0 0.0
      %662 = vmatprep.subr.mxu0 0.0
      %663 = vmatpush1.msra.mxu0 0.0
      %664 = vmatprep.subr.mxu0 0.0
      %665 = vmatpush1.msra.mxu0 0.0
      %666 = vmatprep.subr.mxu0 0.0
      %667 = vmatpush1.msra.mxu0 0.0
      %668 = vmatprep.subr.mxu0 0.0
      %669 = vmatpush1.msra.mxu0 0.0
      %670 = vmatprep.subr.mxu0 0.0
      %671 = vmatpush1.msra.mxu0 0.0
      %672 = vmatprep.subr.mxu0 0.0
      %673 = vmatpush1.msra.mxu0 0.0
      %674 = vmatprep.subr.mxu0 0.0
      %675 = vmatpush1.msra.mxu0 0.0
      %676 = vmatprep.subr.mxu0 0.0
      %677 = vmatpush1.msra.mxu0 0.0
      %678 = vmatprep.subr.mxu0 0.0
      %679 = vmatpush1.msra.mxu0 0.0
      %680 = vmatprep.subr.mxu0 0.0
      %681 = vmatpush1.msra.mxu0 0.0
      %682 = vmatprep.subr.mxu0 0.0
      %683 = vmatpush1.msra.mxu0 0.0
      %684 = vmatprep.subr.mxu0 0.0
      %685 = vmatpush1.msra.mxu0 0.0
      %686 = vmatprep.subr.mxu0 0.0
      %687 = vmatpush1.msra.mxu0 0.0
      %688 = vmatprep.subr.mxu0 0.0
      %689 = vmatpush1.msra.mxu0 0.0
      %690 = vmatprep.subr.mxu0 0.0
      %691 = vmatpush1.msra.mxu0 0.0
      %692 = vmatprep.subr.mxu0 0.0
      %693 = vmatpush1.msra.mxu0 0.0
      %694 = vmatprep.subr.mxu0 0.0
      %695 = vmatpush1.msra.mxu0 0.0
      %696 = vmatprep.subr.mxu0 0.0
      %697 = vmatpush1.msra.mxu0 0.0
      %698 = vmatprep.subr.mxu0 0.0
      %699 = vmatpush1.msra.mxu0 0.0
      %700 = vmatprep.subr.mxu0 0.0
      %701 = vmatpush1.msra.mxu0 0.0
      %702 = vmatprep.subr.mxu0 0.0
      %703 = vmatpush1.msra.mxu0 0.0
      %704 = vmatprep.subr.mxu0 0.0
      %705 = vmatpush1.msra.mxu0 0.0
      %706 = vmatprep.subr.mxu0 0.0
      %707 = vmatpush1.msra.mxu0 0.0
      %708 = vmatprep.subr.mxu0 0.0
      %709 = vmatpush1.msra.mxu0 0.0
      %710 = vmatprep.subr.mxu0 0.0
      %711 = vmatpush1.msra.mxu0 0.0
      %712 = vmatprep.subr.mxu0 0.0
      %713 = vmatpush1.msra.mxu0 0.0
      %714 = vmatprep.mubr.f32.mxu0 0.0
      %v715 = vand.u32 %v205, 4294901760
      %v716 = vsub.f32 %v205, %v715
      %717 = vmatmul.mubr.f32.gmra.mrb[0].mxu0 %v716
      %v718 = vpop.f32.mrb[0].mxu0
      %v719 = vadd.f32 %v555, %v718
      %v720 = vpop.f32.mrb[0].mxu0
      %721 = vmatprep.mubr.f32.mxu0 0.0
      %v722 = vand.u32 %v208, 4294901760
      %v723 = vsub.f32 %v208, %v722
      %724 = vmatmul.mubr.f32.gmra.mrb[0].mxu0 %v723
      %v725 = vpop.f32.mrb[0].mxu0
      %v726 = vadd.f32 %v561, %v725
      %v727 = vpop.f32.mrb[0].mxu0
      %728 = vmatprep.mubr.f32.mxu0 0.0
      %v729 = vand.u32 %v211, 4294901760
      %v730 = vsub.f32 %v211, %v729
      %731 = vmatmul.mubr.f32.gmra.mrb[0].mxu0 %v730
      %v732 = vpop.f32.mrb[0].mxu0
      %v733 = vadd.f32 %v567, %v732
      %v734 = vpop.f32.mrb[0].mxu0
      %735 = vmatprep.mubr.f32.mxu0 0.0
      %v736 = vand.u32 %v214, 4294901760
      %v737 = vsub.f32 %v214, %v736
      %738 = vmatmul.mubr.f32.gmra.mrb[0].mxu0 %v737
      %v739 = vpop.f32.mrb[0].mxu0
      %v740 = vadd.f32 %v573, %v739
      %v741 = vpop.f32.mrb[0].mxu0
      %742 = vmatprep.mubr.f32.mxu0 0.0
      %v743 = vand.u32 %v217, 4294901760
      %v744 = vsub.f32 %v217, %v743
      %745 = vmatmul.mubr.f32.gmra.mrb[0].mxu0 %v744
      %v746 = vpop.f32.mrb[0].mxu0
      %v747 = vadd.f32 %v579, %v746
      %v748 = vpop.f32.mrb[0].mxu0
      %749 = vmatprep.mubr.f32.mxu0 0.0
      %v750 = vand.u32 %v220, 4294901760
      %v751 = vsub.f32 %v220, %v750
      %752 = vmatmul.mubr.f32.gmra.mrb[0].mxu0 %v751
      %v753 = vpop.f32.mrb[0].mxu0
      %v754 = vadd.f32 %v585, %v753
      %v755 = vpop.f32.mrb[0].mxu0
      %756 = vmatprep.mubr.f32.mxu0 0.0
      %v757 = vand.u32 %v223, 4294901760
      %v758 = vsub.f32 %v223, %v757
      %759 = vmatmul.mubr.f32.gmra.mrb[0].mxu0 %v758
      %v760 = vpop.f32.mrb[0].mxu0
      %v761 = vadd.f32 %v591, %v760
      %v762 = vpop.f32.mrb[0].mxu0
      %763 = vmatprep.mubr.f32.mxu0 0.0
      %v764 = vand.u32 %v226, 4294901760
      %v765 = vsub.f32 %v226, %v764
      %766 = vmatmul.mubr.f32.gmra.mrb[0].mxu0 %v765
      %v767 = vpop.f32.mrb[0].mxu0
      %v768 = vadd.f32 %v597, %v767
      %v769 = vpop.f32.mrb[0].mxu0
      %770 = vmatprep.mubr.f32.mxu0 0.0
      %v771 = vand.u32 %v229, 4294901760
      %v772 = vsub.f32 %v229, %v771
      %773 = vmatmul.mubr.f32.gmra.mrb[0].mxu0 %v772
      %v774 = vpop.f32.mrb[0].mxu0
      %v775 = vadd.f32 %v603, %v774
      %v776 = vpop.f32.mrb[0].mxu0
      %777 = vmatprep.mubr.f32.mxu0 0.0
      %v778 = vand.u32 %v232, 4294901760
      %v779 = vsub.f32 %v232, %v778
      %780 = vmatmul.mubr.f32.gmra.mrb[0].mxu0 %v779
      %v781 = vpop.f32.mrb[0].mxu0
      %v782 = vadd.f32 %v609, %v781
      %v783 = vpop.f32.mrb[0].mxu0
      %784 = vmatprep.mubr.f32.mxu0 0.0
      %v785 = vand.u32 %v235, 4294901760
      %v786 = vsub.f32 %v235, %v785
      %787 = vmatmul.mubr.f32.gmra.mrb[0].mxu0 %v786
      %v788 = vpop.f32.mrb[0].mxu0
      %v789 = vadd.f32 %v615, %v788
      %v790 = vpop.f32.mrb[0].mxu0
      %791 = vmatprep.mubr.f32.mxu0 0.0
      %v792 = vand.u32 %v238, 4294901760
      %v793 = vsub.f32 %v238, %v792
      %794 = vmatmul.mubr.f32.gmra.mrb[0].mxu0 %v793
      %v795 = vpop.f32.mrb[0].mxu0
      %v796 = vadd.f32 %v621, %v795
      %v797 = vpop.f32.mrb[0].mxu0
      %798 = vmatprep.mubr.f32.mxu0 0.0
      %v799 = vand.u32 %v241, 4294901760
      %v800 = vsub.f32 %v241, %v799
      %801 = vmatmul.mubr.f32.gmra.mrb[0].mxu0 %v800
      %v802 = vpop.f32.mrb[0].mxu0
      %v803 = vadd.f32 %v627, %v802
      %v804 = vpop.f32.mrb[0].mxu0
      %805 = vmatprep.mubr.f32.mxu0 0.0
      %v806 = vand.u32 %v244, 4294901760
      %v807 = vsub.f32 %v244, %v806
      %808 = vmatmul.mubr.f32.gmra.mrb[0].mxu0 %v807
      %v809 = vpop.f32.mrb[0].mxu0
      %v810 = vadd.f32 %v633, %v809
      %v811 = vpop.f32.mrb[0].mxu0
      %812 = vmatprep.mubr.f32.mxu0 0.0
      %v813 = vand.u32 %v247, 4294901760
      %v814 = vsub.f32 %v247, %v813
      %815 = vmatmul.mubr.f32.gmra.mrb[0].mxu0 %v814
      %v816 = vpop.f32.mrb[0].mxu0
      %v817 = vadd.f32 %v639, %v816
      %v818 = vpop.f32.mrb[0].mxu0
      %819 = vmatprep.mubr.f32.mxu0 0.0
      %v820 = vand.u32 %v250, 4294901760
      %v821 = vsub.f32 %v250, %v820
      %822 = vmatmul.mubr.f32.gmra.mrb[0].mxu0 %v821
      %v823 = vpop.f32.mrb[0].mxu0
      %v824 = vadd.f32 %v645, %v823
      %v825 = vpop.f32.mrb[0].mxu0
      %826 = vdwg.mxu0
      %827 = vmatprep.subr.mxu0 0.0
      %v828 = vand.u32 %v254, 4294901760
      %829 = vmatpush1.msra.mxu0 %v828
      %830 = vmatprep.subr.mxu0 0.0
      %831 = vmatpush1.msra.mxu0 0.0
      %832 = vmatprep.subr.mxu0 0.0
      %833 = vmatpush1.msra.mxu0 0.0
      %834 = vmatprep.subr.mxu0 0.0
      %835 = vmatpush1.msra.mxu0 0.0
      %836 = vmatprep.subr.mxu0 0.0
      %837 = vmatpush1.msra.mxu0 0.0
      %838 = vmatprep.subr.mxu0 0.0
      %839 = vmatpush1.msra.mxu0 0.0
      %840 = vmatprep.subr.mxu0 0.0
      %841 = vmatpush1.msra.mxu0 0.0
      %842 = vmatprep.subr.mxu0 0.0
      %843 = vmatpush1.msra.mxu0 0.0
      %844 = vmatprep.subr.mxu0 0.0
      %845 = vmatpush1.msra.mxu0 0.0
      %846 = vmatprep.subr.mxu0 0.0
      %847 = vmatpush1.msra.mxu0 0.0
      %848 = vmatprep.subr.mxu0 0.0
      %849 = vmatpush1.msra.mxu0 0.0
      %850 = vmatprep.subr.mxu0 0.0
      %851 = vmatpush1.msra.mxu0 0.0
      %852 = vmatprep.subr.mxu0 0.0
      %853 = vmatpush1.msra.mxu0 0.0
      %854 = vmatprep.subr.mxu0 0.0
      %855 = vmatpush1.msra.mxu0 0.0
      %856 = vmatprep.subr.mxu0 0.0
      %857 = vmatpush1.msra.mxu0 0.0
      %858 = vmatprep.subr.mxu0 0.0
      %859 = vmatpush1.msra.mxu0 0.0
      %860 = vmatprep.subr.mxu0 0.0
      %861 = vmatpush1.msra.mxu0 0.0
      %862 = vmatprep.subr.mxu0 0.0
      %863 = vmatpush1.msra.mxu0 0.0
      %864 = vmatprep.subr.mxu0 0.0
      %865 = vmatpush1.msra.mxu0 0.0
      %866 = vmatprep.subr.mxu0 0.0
      %867 = vmatpush1.msra.mxu0 0.0
      %868 = vmatprep.subr.mxu0 0.0
      %869 = vmatpush1.msra.mxu0 0.0
      %870 = vmatprep.subr.mxu0 0.0
      %871 = vmatpush1.msra.mxu0 0.0
      %872 = vmatprep.subr.mxu0 0.0
      %873 = vmatpush1.msra.mxu0 0.0
      %874 = vmatprep.subr.mxu0 0.0
      %875 = vmatpush1.msra.mxu0 0.0
      %876 = vmatprep.subr.mxu0 0.0
      %877 = vmatpush1.msra.mxu0 0.0
      %878 = vmatprep.subr.mxu0 0.0
      %879 = vmatpush1.msra.mxu0 0.0
      %880 = vmatprep.subr.mxu0 0.0
      %881 = vmatpush1.msra.mxu0 0.0
      %882 = vmatprep.subr.mxu0 0.0
      %883 = vmatpush1.msra.mxu0 0.0
      %884 = vmatprep.subr.mxu0 0.0
      %885 = vmatpush1.msra.mxu0 0.0
      %886 = vmatprep.subr.mxu0 0.0
      %887 = vmatpush1.msra.mxu0 0.0
      %888 = vmatprep.subr.mxu0 0.0
      %889 = vmatpush1.msra.mxu0 0.0
      %890 = vmatprep.subr.mxu0 0.0
      %891 = vmatpush1.msra.mxu0 0.0
      %892 = vmatprep.mubr.f32.mxu0 0.0
      %v893 = vand.u32 %v205, 4294901760
      %v894 = vsub.f32 %v205, %v893
      %v895 = vand.u32 %v894, 4294901760
      %896 = vmatmul.mubr.f32.gmra.mrb[0].mxu0 %v895
      %v897 = vpop.f32.mrb[0].mxu0
      %v898 = vadd.f32 %v719, %v897
      %v899 = vpop.f32.mrb[0].mxu0
      %900 = vmatprep.mubr.f32.mxu0 0.0
      %v901 = vand.u32 %v208, 4294901760
      %v902 = vsub.f32 %v208, %v901
      %v903 = vand.u32 %v902, 4294901760
      %904 = vmatmul.mubr.f32.gmra.mrb[0].mxu0 %v903
      %v905 = vpop.f32.mrb[0].mxu0
      %v906 = vadd.f32 %v726, %v905
      %v907 = vpop.f32.mrb[0].mxu0
      %908 = vmatprep.mubr.f32.mxu0 0.0
      %v909 = vand.u32 %v211, 4294901760
      %v910 = vsub.f32 %v211, %v909
      %v911 = vand.u32 %v910, 4294901760
      %912 = vmatmul.mubr.f32.gmra.mrb[0].mxu0 %v911
      %v913 = vpop.f32.mrb[0].mxu0
      %v914 = vadd.f32 %v733, %v913
      %v915 = vpop.f32.mrb[0].mxu0
      %916 = vmatprep.mubr.f32.mxu0 0.0
      %v917 = vand.u32 %v214, 4294901760
      %v918 = vsub.f32 %v214, %v917
      %v919 = vand.u32 %v918, 4294901760
      %920 = vmatmul.mubr.f32.gmra.mrb[0].mxu0 %v919
      %v921 = vpop.f32.mrb[0].mxu0
      %v922 = vadd.f32 %v740, %v921
      %v923 = vpop.f32.mrb[0].mxu0
      %924 = vmatprep.mubr.f32.mxu0 0.0
      %v925 = vand.u32 %v217, 4294901760
      %v926 = vsub.f32 %v217, %v925
      %v927 = vand.u32 %v926, 4294901760
      %928 = vmatmul.mubr.f32.gmra.mrb[0].mxu0 %v927
      %v929 = vpop.f32.mrb[0].mxu0
      %v930 = vadd.f32 %v747, %v929
      %v931 = vpop.f32.mrb[0].mxu0
      %932 = vmatprep.mubr.f32.mxu0 0.0
      %v933 = vand.u32 %v220, 4294901760
      %v934 = vsub.f32 %v220, %v933
      %v935 = vand.u32 %v934, 4294901760
      %936 = vmatmul.mubr.f32.gmra.mrb[0].mxu0 %v935
      %v937 = vpop.f32.mrb[0].mxu0
      %v938 = vadd.f32 %v754, %v937
      %v939 = vpop.f32.mrb[0].mxu0
      %940 = vmatprep.mubr.f32.mxu0 0.0
      %v941 = vand.u32 %v223, 4294901760
      %v942 = vsub.f32 %v223, %v941
      %v943 = vand.u32 %v942, 4294901760
      %944 = vmatmul.mubr.f32.gmra.mrb[0].mxu0 %v943
      %v945 = vpop.f32.mrb[0].mxu0
      %v946 = vadd.f32 %v761, %v945
      %v947 = vpop.f32.mrb[0].mxu0
      %948 = vmatprep.mubr.f32.mxu0 0.0
      %v949 = vand.u32 %v226, 4294901760
      %v950 = vsub.f32 %v226, %v949
      %v951 = vand.u32 %v950, 4294901760
      %952 = vmatmul.mubr.f32.gmra.mrb[0].mxu0 %v951
      %v953 = vpop.f32.mrb[0].mxu0
      %v954 = vadd.f32 %v768, %v953
      %v955 = vpop.f32.mrb[0].mxu0
      %956 = vmatprep.mubr.f32.mxu0 0.0
      %v957 = vand.u32 %v229, 4294901760
      %v958 = vsub.f32 %v229, %v957
      %v959 = vand.u32 %v958, 4294901760
      %960 = vmatmul.mubr.f32.gmra.mrb[0].mxu0 %v959
      %v961 = vpop.f32.mrb[0].mxu0
      %v962 = vadd.f32 %v775, %v961
      %v963 = vpop.f32.mrb[0].mxu0
      %964 = vmatprep.mubr.f32.mxu0 0.0
      %v965 = vand.u32 %v232, 4294901760
      %v966 = vsub.f32 %v232, %v965
      %v967 = vand.u32 %v966, 4294901760
      %968 = vmatmul.mubr.f32.gmra.mrb[0].mxu0 %v967
      %v969 = vpop.f32.mrb[0].mxu0
      %v970 = vadd.f32 %v782, %v969
      %v971 = vpop.f32.mrb[0].mxu0
      %972 = vmatprep.mubr.f32.mxu0 0.0
      %v973 = vand.u32 %v235, 4294901760
      %v974 = vsub.f32 %v235, %v973
      %v975 = vand.u32 %v974, 4294901760
      %976 = vmatmul.mubr.f32.gmra.mrb[0].mxu0 %v975
      %v977 = vpop.f32.mrb[0].mxu0
      %v978 = vadd.f32 %v789, %v977
      %v979 = vpop.f32.mrb[0].mxu0
      %980 = vmatprep.mubr.f32.mxu0 0.0
      %v981 = vand.u32 %v238, 4294901760
      %v982 = vsub.f32 %v238, %v981
      %v983 = vand.u32 %v982, 4294901760
      %984 = vmatmul.mubr.f32.gmra.mrb[0].mxu0 %v983
      %v985 = vpop.f32.mrb[0].mxu0
      %v986 = vadd.f32 %v796, %v985
      %v987 = vpop.f32.mrb[0].mxu0
      %988 = vmatprep.mubr.f32.mxu0 0.0
      %v989 = vand.u32 %v241, 4294901760
      %v990 = vsub.f32 %v241, %v989
      %v991 = vand.u32 %v990, 4294901760
      %992 = vmatmul.mubr.f32.gmra.mrb[0].mxu0 %v991
      %v993 = vpop.f32.mrb[0].mxu0
      %v994 = vadd.f32 %v803, %v993
      %v995 = vpop.f32.mrb[0].mxu0
      %996 = vmatprep.mubr.f32.mxu0 0.0
      %v997 = vand.u32 %v244, 4294901760
      %v998 = vsub.f32 %v244, %v997
      %v999 = vand.u32 %v998, 4294901760
      %1000 = vmatmul.mubr.f32.gmra.mrb[0].mxu0 %v999
      %v1001 = vpop.f32.mrb[0].mxu0
      %v1002 = vadd.f32 %v810, %v1001
      %v1003 = vpop.f32.mrb[0].mxu0
      %1004 = vmatprep.mubr.f32.mxu0 0.0
      %v1005 = vand.u32 %v247, 4294901760
      %v1006 = vsub.f32 %v247, %v1005
      %v1007 = vand.u32 %v1006, 4294901760
      %1008 = vmatmul.mubr.f32.gmra.mrb[0].mxu0 %v1007
      %v1009 = vpop.f32.mrb[0].mxu0
      %v1010 = vadd.f32 %v817, %v1009
      %v1011 = vpop.f32.mrb[0].mxu0
      %1012 = vmatprep.mubr.f32.mxu0 0.0
      %v1013 = vand.u32 %v250, 4294901760
      %v1014 = vsub.f32 %v250, %v1013
      %v1015 = vand.u32 %v1014, 4294901760
      %1016 = vmatmul.mubr.f32.gmra.mrb[0].mxu0 %v1015
      %v1017 = vpop.f32.mrb[0].mxu0
      %v1018 = vadd.f32 %v824, %v1017
      %v1019 = vpop.f32.mrb[0].mxu0
      %1020 = vdwg.mxu0
      %1021 = vmatprep.subr.mxu0 0.0
      %v1022 = vand.u32 %v254, 4294901760
      %v1023 = vsub.f32 %v254, %v1022
      %v1024 = vand.u32 %v1023, 4294901760
      %1025 = vmatpush1.msra.mxu0 %v1024
      %1026 = vmatprep.subr.mxu0 0.0
      %1027 = vmatpush1.msra.mxu0 0.0
      %1028 = vmatprep.subr.mxu0 0.0
      %1029 = vmatpush1.msra.mxu0 0.0
      %1030 = vmatprep.subr.mxu0 0.0
      %1031 = vmatpush1.msra.mxu0 0.0
      %1032 = vmatprep.subr.mxu0 0.0
      %1033 = vmatpush1.msra.mxu0 0.0
      %1034 = vmatprep.subr.mxu0 0.0
      %1035 = vmatpush1.msra.mxu0 0.0
      %1036 = vmatprep.subr.mxu0 0.0
      %1037 = vmatpush1.msra.mxu0 0.0
      %1038 = vmatprep.subr.mxu0 0.0
      %1039 = vmatpush1.msra.mxu0 0.0
      %1040 = vmatprep.subr.mxu0 0.0
      %1041 = vmatpush1.msra.mxu0 0.0
      %1042 = vmatprep.subr.mxu0 0.0
      %1043 = vmatpush1.msra.mxu0 0.0
      %1044 = vmatprep.subr.mxu0 0.0
      %1045 = vmatpush1.msra.mxu0 0.0
      %1046 = vmatprep.subr.mxu0 0.0
      %1047 = vmatpush1.msra.mxu0 0.0
      %1048 = vmatprep.subr.mxu0 0.0
      %1049 = vmatpush1.msra.mxu0 0.0
      %1050 = vmatprep.subr.mxu0 0.0
      %1051 = vmatpush1.msra.mxu0 0.0
      %1052 = vmatprep.subr.mxu0 0.0
      %1053 = vmatpush1.msra.mxu0 0.0
      %1054 = vmatprep.subr.mxu0 0.0
      %1055 = vmatpush1.msra.mxu0 0.0
      %1056 = vmatprep.subr.mxu0 0.0
      %1057 = vmatpush1.msra.mxu0 0.0
      %1058 = vmatprep.subr.mxu0 0.0
      %1059 = vmatpush1.msra.mxu0 0.0
      %1060 = vmatprep.subr.mxu0 0.0
      %1061 = vmatpush1.msra.mxu0 0.0
      %1062 = vmatprep.subr.mxu0 0.0
      %1063 = vmatpush1.msra.mxu0 0.0
      %1064 = vmatprep.subr.mxu0 0.0
      %1065 = vmatpush1.msra.mxu0 0.0
      %1066 = vmatprep.subr.mxu0 0.0
      %1067 = vmatpush1.msra.mxu0 0.0
      %1068 = vmatprep.subr.mxu0 0.0
      %1069 = vmatpush1.msra.mxu0 0.0
      %1070 = vmatprep.subr.mxu0 0.0
      %1071 = vmatpush1.msra.mxu0 0.0
      %1072 = vmatprep.subr.mxu0 0.0
      %1073 = vmatpush1.msra.mxu0 0.0
      %1074 = vmatprep.subr.mxu0 0.0
      %1075 = vmatpush1.msra.mxu0 0.0
      %1076 = vmatprep.subr.mxu0 0.0
      %1077 = vmatpush1.msra.mxu0 0.0
      %1078 = vmatprep.subr.mxu0 0.0
      %1079 = vmatpush1.msra.mxu0 0.0
      %1080 = vmatprep.subr.mxu0 0.0
      %1081 = vmatpush1.msra.mxu0 0.0
      %1082 = vmatprep.subr.mxu0 0.0
      %1083 = vmatpush1.msra.mxu0 0.0
      %1084 = vmatprep.subr.mxu0 0.0
      %1085 = vmatpush1.msra.mxu0 0.0
      %1086 = vmatprep.subr.mxu0 0.0
      %1087 = vmatpush1.msra.mxu0 0.0
      %1088 = vmatprep.mubr.f32.mxu0 0.0
      %v1089 = vand.u32 %v205, 4294901760
      %1090 = vmatmul.mubr.f32.gmra.mrb[0].mxu0 %v1089
      %v1091 = vpop.f32.mrb[0].mxu0
      %v1092 = vadd.f32 %v898, %v1091
      %v1093 = vpop.f32.mrb[0].mxu0
      %1094 = vmatprep.mubr.f32.mxu0 0.0
      %v1095 = vand.u32 %v208, 4294901760
      %1096 = vmatmul.mubr.f32.gmra.mrb[0].mxu0 %v1095
      %v1097 = vpop.f32.mrb[0].mxu0
      %v1098 = vadd.f32 %v906, %v1097
      %v1099 = vpop.f32.mrb[0].mxu0
      %1100 = vmatprep.mubr.f32.mxu0 0.0
      %v1101 = vand.u32 %v211, 4294901760
      %1102 = vmatmul.mubr.f32.gmra.mrb[0].mxu0 %v1101
      %v1103 = vpop.f32.mrb[0].mxu0
      %v1104 = vadd.f32 %v914, %v1103
      %v1105 = vpop.f32.mrb[0].mxu0
      %1106 = vmatprep.mubr.f32.mxu0 0.0
      %v1107 = vand.u32 %v214, 4294901760
      %1108 = vmatmul.mubr.f32.gmra.mrb[0].mxu0 %v1107
      %v1109 = vpop.f32.mrb[0].mxu0
      %v1110 = vadd.f32 %v922, %v1109
      %v1111 = vpop.f32.mrb[0].mxu0
      %1112 = vmatprep.mubr.f32.mxu0 0.0
      %v1113 = vand.u32 %v217, 4294901760
      %1114 = vmatmul.mubr.f32.gmra.mrb[0].mxu0 %v1113
      %v1115 = vpop.f32.mrb[0].mxu0
      %v1116 = vadd.f32 %v930, %v1115
      %v1117 = vpop.f32.mrb[0].mxu0
      %1118 = vmatprep.mubr.f32.mxu0 0.0
      %v1119 = vand.u32 %v220, 4294901760
      %1120 = vmatmul.mubr.f32.gmra.mrb[0].mxu0 %v1119
      %v1121 = vpop.f32.mrb[0].mxu0
      %v1122 = vadd.f32 %v938, %v1121
      %v1123 = vpop.f32.mrb[0].mxu0
      %1124 = vmatprep.mubr.f32.mxu0 0.0
      %v1125 = vand.u32 %v223, 4294901760
      %1126 = vmatmul.mubr.f32.gmra.mrb[0].mxu0 %v1125
      %v1127 = vpop.f32.mrb[0].mxu0
      %v1128 = vadd.f32 %v946, %v1127
      %v1129 = vpop.f32.mrb[0].mxu0
      %1130 = vmatprep.mubr.f32.mxu0 0.0
      %v1131 = vand.u32 %v226, 4294901760
      %1132 = vmatmul.mubr.f32.gmra.mrb[0].mxu0 %v1131
      %v1133 = vpop.f32.mrb[0].mxu0
      %v1134 = vadd.f32 %v954, %v1133
      %v1135 = vpop.f32.mrb[0].mxu0
      %1136 = vmatprep.mubr.f32.mxu0 0.0
      %v1137 = vand.u32 %v229, 4294901760
      %1138 = vmatmul.mubr.f32.gmra.mrb[0].mxu0 %v1137
      %v1139 = vpop.f32.mrb[0].mxu0
      %v1140 = vadd.f32 %v962, %v1139
      %v1141 = vpop.f32.mrb[0].mxu0
      %1142 = vmatprep.mubr.f32.mxu0 0.0
      %v1143 = vand.u32 %v232, 4294901760
      %1144 = vmatmul.mubr.f32.gmra.mrb[0].mxu0 %v1143
      %v1145 = vpop.f32.mrb[0].mxu0
      %v1146 = vadd.f32 %v970, %v1145
      %v1147 = vpop.f32.mrb[0].mxu0
      %1148 = vmatprep.mubr.f32.mxu0 0.0
      %v1149 = vand.u32 %v235, 4294901760
      %1150 = vmatmul.mubr.f32.gmra.mrb[0].mxu0 %v1149
      %v1151 = vpop.f32.mrb[0].mxu0
      %v1152 = vadd.f32 %v978, %v1151
      %v1153 = vpop.f32.mrb[0].mxu0
      %1154 = vmatprep.mubr.f32.mxu0 0.0
      %v1155 = vand.u32 %v238, 4294901760
      %1156 = vmatmul.mubr.f32.gmra.mrb[0].mxu0 %v1155
      %v1157 = vpop.f32.mrb[0].mxu0
      %v1158 = vadd.f32 %v986, %v1157
      %v1159 = vpop.f32.mrb[0].mxu0
      %1160 = vmatprep.mubr.f32.mxu0 0.0
      %v1161 = vand.u32 %v241, 4294901760
      %1162 = vmatmul.mubr.f32.gmra.mrb[0].mxu0 %v1161
      %v1163 = vpop.f32.mrb[0].mxu0
      %v1164 = vadd.f32 %v994, %v1163
      %v1165 = vpop.f32.mrb[0].mxu0
      %1166 = vmatprep.mubr.f32.mxu0 0.0
      %v1167 = vand.u32 %v244, 4294901760
      %1168 = vmatmul.mubr.f32.gmra.mrb[0].mxu0 %v1167
      %v1169 = vpop.f32.mrb[0].mxu0
      %v1170 = vadd.f32 %v1002, %v1169
      %v1171 = vpop.f32.mrb[0].mxu0
      %1172 = vmatprep.mubr.f32.mxu0 0.0
      %v1173 = vand.u32 %v247, 4294901760
      %1174 = vmatmul.mubr.f32.gmra.mrb[0].mxu0 %v1173
      %v1175 = vpop.f32.mrb[0].mxu0
      %v1176 = vadd.f32 %v1010, %v1175
      %v1177 = vpop.f32.mrb[0].mxu0
      %1178 = vmatprep.mubr.f32.mxu0 0.0
      %v1179 = vand.u32 %v250, 4294901760
      %1180 = vmatmul.mubr.f32.gmra.mrb[0].mxu0 %v1179
      %v1181 = vpop.f32.mrb[0].mxu0
      %v1182 = vadd.f32 %v1018, %v1181
      %v1183 = vpop.f32.mrb[0].mxu0
      %1184 = vdwg.mxu0
      %1185 = vmatprep.subr.mxu0 0.0
      %v1186 = vand.u32 %v254, 4294901760
      %1187 = vmatpush1.msra.mxu0 %v1186
      %1188 = vmatprep.subr.mxu0 0.0
      %1189 = vmatpush1.msra.mxu0 0.0
      %1190 = vmatprep.subr.mxu0 0.0
      %1191 = vmatpush1.msra.mxu0 0.0
      %1192 = vmatprep.subr.mxu0 0.0
      %1193 = vmatpush1.msra.mxu0 0.0
      %1194 = vmatprep.subr.mxu0 0.0
      %1195 = vmatpush1.msra.mxu0 0.0
      %1196 = vmatprep.subr.mxu0 0.0
      %1197 = vmatpush1.msra.mxu0 0.0
      %1198 = vmatprep.subr.mxu0 0.0
      %1199 = vmatpush1.msra.mxu0 0.0
      %1200 = vmatprep.subr.mxu0 0.0
      %1201 = vmatpush1.msra.mxu0 0.0
      %1202 = vmatprep.subr.mxu0 0.0
      %1203 = vmatpush1.msra.mxu0 0.0
      %1204 = vmatprep.subr.mxu0 0.0
      %1205 = vmatpush1.msra.mxu0 0.0
      %1206 = vmatprep.subr.mxu0 0.0
      %1207 = vmatpush1.msra.mxu0 0.0
      %1208 = vmatprep.subr.mxu0 0.0
      %1209 = vmatpush1.msra.mxu0 0.0
      %1210 = vmatprep.subr.mxu0 0.0
      %1211 = vmatpush1.msra.mxu0 0.0
      %1212 = vmatprep.subr.mxu0 0.0
      %1213 = vmatpush1.msra.mxu0 0.0
      %1214 = vmatprep.subr.mxu0 0.0
      %1215 = vmatpush1.msra.mxu0 0.0
      %1216 = vmatprep.subr.mxu0 0.0
      %1217 = vmatpush1.msra.mxu0 0.0
      %1218 = vmatprep.subr.mxu0 0.0
      %1219 = vmatpush1.msra.mxu0 0.0
      %1220 = vmatprep.subr.mxu0 0.0
      %1221 = vmatpush1.msra.mxu0 0.0
      %1222 = vmatprep.subr.mxu0 0.0
      %1223 = vmatpush1.msra.mxu0 0.0
      %1224 = vmatprep.subr.mxu0 0.0
      %1225 = vmatpush1.msra.mxu0 0.0
      %1226 = vmatprep.subr.mxu0 0.0
      %1227 = vmatpush1.msra.mxu0 0.0
      %1228 = vmatprep.subr.mxu0 0.0
      %1229 = vmatpush1.msra.mxu0 0.0
      %1230 = vmatprep.subr.mxu0 0.0
      %1231 = vmatpush1.msra.mxu0 0.0
      %1232 = vmatprep.subr.mxu0 0.0
      %1233 = vmatpush1.msra.mxu0 0.0
      %1234 = vmatprep.subr.mxu0 0.0
      %1235 = vmatpush1.msra.mxu0 0.0
      %1236 = vmatprep.subr.mxu0 0.0
      %1237 = vmatpush1.msra.mxu0 0.0
      %1238 = vmatprep.subr.mxu0 0.0
      %1239 = vmatpush1.msra.mxu0 0.0
      %1240 = vmatprep.subr.mxu0 0.0
      %1241 = vmatpush1.msra.mxu0 0.0
      %1242 = vmatprep.subr.mxu0 0.0
      %1243 = vmatpush1.msra.mxu0 0.0
      %1244 = vmatprep.subr.mxu0 0.0
      %1245 = vmatpush1.msra.mxu0 0.0
      %1246 = vmatprep.subr.mxu0 0.0
      %1247 = vmatpush1.msra.mxu0 0.0
      %1248 = vmatprep.subr.mxu0 0.0
      %1249 = vmatpush1.msra.mxu0 0.0
      %1250 = vmatprep.mubr.f32.mxu0 0.0
      %v1251 = vand.u32 %v205, 4294901760
      %1252 = vmatmul.mubr.f32.gmra.mrb[0].mxu0 %v1251
      %v1253 = vpop.f32.mrb[0].mxu0
      %v1254 = vadd.f32 %v1092, %v1253
      %v1255 = vpop.f32.mrb[0].mxu0
      %1256 = vmatprep.mubr.f32.mxu0 0.0
      %v1257 = vand.u32 %v208, 4294901760
      %1258 = vmatmul.mubr.f32.gmra.mrb[0].mxu0 %v1257
      %v1259 = vpop.f32.mrb[0].mxu0
      %v1260 = vadd.f32 %v1098, %v1259
      %v1261 = vpop.f32.mrb[0].mxu0
      %1262 = vmatprep.mubr.f32.mxu0 0.0
      %v1263 = vand.u32 %v211, 4294901760
      %1264 = vmatmul.mubr.f32.gmra.mrb[0].mxu0 %v1263
      %v1265 = vpop.f32.mrb[0].mxu0
      %v1266 = vadd.f32 %v1104, %v1265
      %v1267 = vpop.f32.mrb[0].mxu0
      %1268 = vmatprep.mubr.f32.mxu0 0.0
      %v1269 = vand.u32 %v214, 4294901760
      %1270 = vmatmul.mubr.f32.gmra.mrb[0].mxu0 %v1269
      %v1271 = vpop.f32.mrb[0].mxu0
      %v1272 = vadd.f32 %v1110, %v1271
      %v1273 = vpop.f32.mrb[0].mxu0
      %1274 = vmatprep.mubr.f32.mxu0 0.0
      %v1275 = vand.u32 %v217, 4294901760
      %1276 = vmatmul.mubr.f32.gmra.mrb[0].mxu0 %v1275
      %v1277 = vpop.f32.mrb[0].mxu0
      %v1278 = vadd.f32 %v1116, %v1277
      %v1279 = vpop.f32.mrb[0].mxu0
      %1280 = vmatprep.mubr.f32.mxu0 0.0
      %v1281 = vand.u32 %v220, 4294901760
      %1282 = vmatmul.mubr.f32.gmra.mrb[0].mxu0 %v1281
      %v1283 = vpop.f32.mrb[0].mxu0
      %v1284 = vadd.f32 %v1122, %v1283
      %v1285 = vpop.f32.mrb[0].mxu0
      %1286 = vmatprep.mubr.f32.mxu0 0.0
      %v1287 = vand.u32 %v223, 4294901760
      %1288 = vmatmul.mubr.f32.gmra.mrb[0].mxu0 %v1287
      %v1289 = vpop.f32.mrb[0].mxu0
      %v1290 = vadd.f32 %v1128, %v1289
      %v1291 = vpop.f32.mrb[0].mxu0
      %1292 = vmatprep.mubr.f32.mxu0 0.0
      %v1293 = vand.u32 %v226, 4294901760
      %1294 = vmatmul.mubr.f32.gmra.mrb[0].mxu0 %v1293
      %v1295 = vpop.f32.mrb[0].mxu0
      %v1296 = vadd.f32 %v1134, %v1295
      %v1297 = vpop.f32.mrb[0].mxu0
      %1298 = vmatprep.mubr.f32.mxu0 0.0
      %v1299 = vand.u32 %v229, 4294901760
      %1300 = vmatmul.mubr.f32.gmra.mrb[0].mxu0 %v1299
      %v1301 = vpop.f32.mrb[0].mxu0
      %v1302 = vadd.f32 %v1140, %v1301
      %v1303 = vpop.f32.mrb[0].mxu0
      %1304 = vmatprep.mubr.f32.mxu0 0.0
      %v1305 = vand.u32 %v232, 4294901760
      %1306 = vmatmul.mubr.f32.gmra.mrb[0].mxu0 %v1305
      %v1307 = vpop.f32.mrb[0].mxu0
      %v1308 = vadd.f32 %v1146, %v1307
      %v1309 = vpop.f32.mrb[0].mxu0
      %1310 = vmatprep.mubr.f32.mxu0 0.0
      %v1311 = vand.u32 %v235, 4294901760
      %1312 = vmatmul.mubr.f32.gmra.mrb[0].mxu0 %v1311
      %v1313 = vpop.f32.mrb[0].mxu0
      %v1314 = vadd.f32 %v1152, %v1313
      %v1315 = vpop.f32.mrb[0].mxu0
      %1316 = vmatprep.mubr.f32.mxu0 0.0
      %v1317 = vand.u32 %v238, 4294901760
      %1318 = vmatmul.mubr.f32.gmra.mrb[0].mxu0 %v1317
      %v1319 = vpop.f32.mrb[0].mxu0
      %v1320 = vadd.f32 %v1158, %v1319
      %v1321 = vpop.f32.mrb[0].mxu0
      %1322 = vmatprep.mubr.f32.mxu0 0.0
      %v1323 = vand.u32 %v241, 4294901760
      %1324 = vmatmul.mubr.f32.gmra.mrb[0].mxu0 %v1323
      %v1325 = vpop.f32.mrb[0].mxu0
      %v1326 = vadd.f32 %v1164, %v1325
      %v1327 = vpop.f32.mrb[0].mxu0
      %1328 = vmatprep.mubr.f32.mxu0 0.0
      %v1329 = vand.u32 %v244, 4294901760
      %1330 = vmatmul.mubr.f32.gmra.mrb[0].mxu0 %v1329
      %v1331 = vpop.f32.mrb[0].mxu0
      %v1332 = vadd.f32 %v1170, %v1331
      %v1333 = vpop.f32.mrb[0].mxu0
      %1334 = vmatprep.mubr.f32.mxu0 0.0
      %v1335 = vand.u32 %v247, 4294901760
      %1336 = vmatmul.mubr.f32.gmra.mrb[0].mxu0 %v1335
      %v1337 = vpop.f32.mrb[0].mxu0
      %v1338 = vadd.f32 %v1176, %v1337
      %v1339 = vpop.f32.mrb[0].mxu0
      %1340 = vmatprep.mubr.f32.mxu0 0.0
      %v1341 = vand.u32 %v250, 4294901760
      %1342 = vmatmul.mubr.f32.gmra.mrb[0].mxu0 %v1341
      %v1343 = vpop.f32.mrb[0].mxu0
      %v1344 = vadd.f32 %v1182, %v1343
      %v1345 = vpop.f32.mrb[0].mxu0
      %1346 = vdwg.mxu0
      %vm1347 = vcmask 130048
      %1348 = vst.msk [vmem:[%s177] sm:$0xff] %vm1347, %v1254
      %1349 = vst.msk [vmem:[%s177 + $0x8] sm:$0xff] %vm1347, %v1260
      %1350 = vst.msk [vmem:[%s177 + $0x20] sm:$0xff] %vm1347, %v1266
      %1351 = vst.msk [vmem:[%s177 + $0x28] sm:$0xff] %vm1347, %v1272
      %1352 = vst.msk [vmem:[%s177 + $0x40] sm:$0xff] %vm1347, %v1278
      %1353 = vst.msk [vmem:[%s177 + $0x48] sm:$0xff] %vm1347, %v1284
      %1354 = vst.msk [vmem:[%s177 + $0x60] sm:$0xff] %vm1347, %v1290
      %1355 = vst.msk [vmem:[%s177 + $0x68] sm:$0xff] %vm1347, %v1296
      %1356 = vst.msk [vmem:[%s177 + $0x80] sm:$0xff] %vm1347, %v1302
      %1357 = vst.msk [vmem:[%s177 + $0x88] sm:$0xff] %vm1347, %v1308
      %1358 = vst.msk [vmem:[%s177 + $0xa0] sm:$0xff] %vm1347, %v1314
      %1359 = vst.msk [vmem:[%s177 + $0xa8] sm:$0xff] %vm1347, %v1320
      %1360 = vst.msk [vmem:[%s177 + $0xc0] sm:$0xff] %vm1347, %v1326
      %1361 = vst.msk [vmem:[%s177 + $0xc8] sm:$0xff] %vm1347, %v1332
      %1362 = vst.msk [vmem:[%s177 + $0xe0] sm:$0xff] %vm1347, %v1338
      %1363 = vst.msk [vmem:[%s177 + $0xe8] sm:$0xff] %vm1347, %v1344
      %1380 = vrot.lane.b32.xlu0 %v1254, 112
      %v1381 = vpop.permute.xlu0 %1380
      %1382 = vrot.lane.b32.xlu0 %v1260, 112
      %v1383 = vpop.permute.xlu0 %1382
      %1384 = vrot.lane.b32.xlu0 %v1266, 112
      %v1385 = vpop.permute.xlu0 %1384
      %1386 = vrot.lane.b32.xlu0 %v1272, 112
      %v1387 = vpop.permute.xlu0 %1386
      %1388 = vrot.lane.b32.xlu0 %v1278, 112
      %v1389 = vpop.permute.xlu0 %1388
      %1390 = vrot.lane.b32.xlu0 %v1284, 112
      %v1391 = vpop.permute.xlu0 %1390
      %1392 = vrot.lane.b32.xlu0 %v1290, 112
      %v1393 = vpop.permute.xlu0 %1392
      %1394 = vrot.lane.b32.xlu0 %v1296, 112
      %v1395 = vpop.permute.xlu0 %1394
      %1396 = vrot.lane.b32.xlu0 %v1302, 112
      %v1397 = vpop.permute.xlu0 %1396
      %1398 = vrot.lane.b32.xlu0 %v1308, 112
      %v1399 = vpop.permute.xlu0 %1398
      %1400 = vrot.lane.b32.xlu0 %v1314, 112
      %v1401 = vpop.permute.xlu0 %1400
      %1402 = vrot.lane.b32.xlu0 %v1320, 112
      %v1403 = vpop.permute.xlu0 %1402
      %1404 = vrot.lane.b32.xlu0 %v1326, 112
      %v1405 = vpop.permute.xlu0 %1404
      %1406 = vrot.lane.b32.xlu0 %v1332, 112
      %v1407 = vpop.permute.xlu0 %1406
      %1408 = vrot.lane.b32.xlu0 %v1338, 112
      %v1409 = vpop.permute.xlu0 %1408
      %1410 = vrot.lane.b32.xlu0 %v1344, 112
      %v1411 = vpop.permute.xlu0 %1410
      %s1428 = scalar_lea.vmem %s177, 16
      %1429 = vst.msk [vmem:[%s1428] sm:$0xff] %vm1347, %v1381
      %1430 = vst.msk [vmem:[%s1428 + $0x8] sm:$0xff] %vm1347, %v1383
      %1431 = vst.msk [vmem:[%s1428 + $0x20] sm:$0xff] %vm1347, %v1385
      %1432 = vst.msk [vmem:[%s1428 + $0x28] sm:$0xff] %vm1347, %v1387
      %1433 = vst.msk [vmem:[%s1428 + $0x40] sm:$0xff] %vm1347, %v1389
      %1434 = vst.msk [vmem:[%s1428 + $0x48] sm:$0xff] %vm1347, %v1391
      %1435 = vst.msk [vmem:[%s1428 + $0x60] sm:$0xff] %vm1347, %v1393
      %1436 = vst.msk [vmem:[%s1428 + $0x68] sm:$0xff] %vm1347, %v1395
      %1437 = vst.msk [vmem:[%s1428 + $0x80] sm:$0xff] %vm1347, %v1397
      %1438 = vst.msk [vmem:[%s1428 + $0x88] sm:$0xff] %vm1347, %v1399
      %1439 = vst.msk [vmem:[%s1428 + $0xa0] sm:$0xff] %vm1347, %v1401
      %1440 = vst.msk [vmem:[%s1428 + $0xa8] sm:$0xff] %vm1347, %v1403
      %1441 = vst.msk [vmem:[%s1428 + $0xc0] sm:$0xff] %vm1347, %v1405
      %1442 = vst.msk [vmem:[%s1428 + $0xc8] sm:$0xff] %vm1347, %v1407
      %1443 = vst.msk [vmem:[%s1428 + $0xe0] sm:$0xff] %vm1347, %v1409
      %1444 = vst.msk [vmem:[%s1428 + $0xe8] sm:$0xff] %vm1347, %v1411
      %s1445 = smul.u32 8, %s14
      %p1446 = scmp.lt.s32.totalorder %s1445, 31
      %s1447 = scalar_select %p1446, %s1445, 31
      %s1448 = smul.addr %s1447, 4
      %s1449 = smul.addr %s1448, 8
      %s1450 = scalar_lea.vmem %s3, %s1449
      // Predicated region
      $region33: #{tpu_custom_call.1} parent=31 // pred_check
        %p1451 = pneg %p100
      $region34: #{tpu_custom_call.1} parent=31 // pred_check_branch
        %1453 = sbr.rel (%p1451) target = $region36
      $region35: #{tpu_custom_call.1} parent=31 // pred_region
        %s1454 = smul.u32 8, %s14
      $region36: #{tpu_custom_call.1} parent=31 // pred_fallthru
        _
    $region32: #{tpu_custom_call.1} parent=5 // pred_fallthru
      _
    %p1455 = scmp.le.s32.totalorder 2, %s9
    // Predicated region
    $region37: #{tpu_custom_call.1} parent=5 // pred_check
      %p1456 = pneg %p1455
    $region38: #{tpu_custom_call.1} parent=5 // pred_check_branch
      %1458 = sbr.rel (%p1456) target = $region40
    $region39: #{tpu_custom_call.1} parent=5 // pred_region
      %s1459 = ssub.s32 %s9, 2
      // Predicated region
      $region41: #{tpu_custom_call.1} parent=39 // pred_check
        %p1460 = pneg %p106
      $region42: #{tpu_custom_call.1} parent=39 // pred_check_branch
        %1462 = sbr.rel (%p1460) target = $region44
      $region43: #{tpu_custom_call.1} parent=39 // pred_region
        %s1463 = smul.u32 8, %s15
        %p1464 = scmp.lt.s32.totalorder %s1463, 31
        %s1465 = scalar_select %p1464, %s1463, 31
        %s1466 = smul.addr %s1465, 4
        %s1467 = smul.addr %s1466, 8
        %s1468 = scalar_lea.vmem %s3, %s1467
      $region44: #{tpu_custom_call.1} parent=39 // pred_fallthru
        _
    $region40: #{tpu_custom_call.1} parent=5 // pred_fallthru
      _
  $region6: #{tpu_custom_call.1} parent=0 // loop_footer
    %s13 = sadd.s32 1, %s9
  $region7: #{tpu_custom_call.1} parent=0 // loop_footer_branch
    %8 = sbr.rel target = $region3
  $region8: #{tpu_custom_call.1} parent=0 // loop_exit
    _

</llo_original>
